<compile_context>
chip_gen: v6e
topology: v6e:2x2x1
jax: 0.10.0
libtpu: 0.0.40
codegen_flags: <defaults>
</compile_context>

<pallas_src>
import math
from functools import partial

import jax
import jax.numpy as jnp
from jax.experimental import pallas as pl
from jax.experimental.pallas import tpu as pltpu


def _mha_kernel(q_ref, k_ref, v_ref, wq_ref, wk_ref, wv_ref, fcw_ref, fcb_ref,
                o_ref, *, h, d_k, seq, b_blk):
    """One grid step == B_blk batch elements.  Fused projections, head-batched
    attention, and the cat+fc fold, all in VMEM."""
    E = h * d_k
    M = b_blk * seq

    # Flatten batch into the matmul M dimension (leading-dim merge, layout
    # preserving since seq is a multiple of 8), cast activations to bf16.
    xq = q_ref[...].reshape(M, E).astype(jnp.bfloat16)
    xk = k_ref[...].reshape(M, E).astype(jnp.bfloat16)
    xv = v_ref[...].reshape(M, E).astype(jnp.bfloat16)

    # Fused lane-dense projections: (M, E) @ (E, E), f32 accumulation.
    # 1/sqrt(d_k) is already folded into wq on the host.
    Qf = jnp.dot(xq, wq_ref[...], preferred_element_type=jnp.float32)
    Kf = jnp.dot(xk, wk_ref[...], preferred_element_type=jnp.float32)
    Vf = jnp.dot(xv, wv_ref[...], preferred_element_type=jnp.float32)

    def split_heads(x):
        # (M, E) -> (h * b_blk, seq, d_k); static lane slices + leading stack
        # (head boundaries are not 128-aligned at d_k=4, see header comment).
        x3 = x.reshape(b_blk, seq, E)
        parts = [x3[:, :, i * d_k:(i + 1) * d_k] for i in range(h)]
        return jnp.stack(parts, axis=0).reshape(h * b_blk, seq, d_k)

    Qh = split_heads(Qf).astype(jnp.bfloat16)   # (h*b_blk, S, d_k)
    Kh = split_heads(Kf).astype(jnp.bfloat16)
    Vh = split_heads(Vf).astype(jnp.bfloat16)

    # Head-batched attention: single batched dot_general for the scores,
    # single batched softmax, single batched dot_general for the context.
    s = jnp.einsum('bqd,bkd->bqk', Qh, Kh,
                   preferred_element_type=jnp.float32)        # (h*b_blk, S, S)
    m = jnp.max(s, axis=-1, keepdims=True)
    e = jnp.exp(s - m)
    p = e * pl.reciprocal(jnp.sum(e, axis=-1, keepdims=True), approx=True)

    ctx = jnp.einsum('bqk,bkd->bqd', p.astype(jnp.bfloat16), Vh,
                     preferred_element_type=jnp.float32)      # (h*b_blk, S, d_k)

    # cat + fc fold as ONE h-batched matmul + leading-axis sum:
    #   out[m] = sum_h ctx[h, m] @ fc_w[h*d_k:(h+1)*d_k]  ==  cat(ctx) @ fc_w
    ctx_h = ctx.astype(jnp.bfloat16).reshape(h, M, d_k)        # head-major batch
    out_h = jnp.einsum('hmd,hde->hme', ctx_h, fcw_ref[...],
                       preferred_element_type=jnp.float32)     # (h, M, E)
    out = jnp.sum(out_h, axis=0) + fcb_ref[...]                # (M, E), bias once

    o_ref[...] = out.reshape(b_blk, seq, E).astype(o_ref.dtype)


def _pick_batch_block(B, S, max_rows=1024):
    """Largest divisor of B such that B_blk*S rows stay a modest VMEM tile.
    At toy sizes this returns B (single grid step, batch fully folded into M);
    at larger B it yields >=2 parallel steps so both v7x TensorCores get work."""
    bb = max(1, min(B, max_rows // max(S, 1)))
    while B % bb:
        bb -= 1
    return bb


def multi_head_attention(query, key, value, wq, wk, wv, fc_w, fc_b, *, h):
    """query/key/value: (B, S, E). wq/wk/wv: (h, E, d_k) (pre-transposed so the
    projection is x @ W).  fc_w: (E, E) pre-transposed (out = x @ fc_w + fc_b).
    fc_b: (E,).  The attention mask is ignored, mirroring the PyTorch module's
    non-in-place masked_fill (it has no effect on the reference output)."""
    B, S, E = query.shape
    assert E % h == 0, "embedding_dim must be divisible by h"
    d_k = E // h
    assert S % 8 == 0, "seq length must be a multiple of 8 (sublane tile)"
    scale = 1.0 / math.sqrt(d_k)

    # Host-side weight fusion: (h, E, d_k) -> (E, h*d_k), column block hd is
    # head hd.  Scale folded into the Q weight.  Weights cast to bf16 for MXU.
    # (A single (E, 3E) QKV fusion only pays when E % 128 == 0; E=32 here.)
    wq_f = (jnp.transpose(wq, (1, 0, 2)).reshape(E, E) * scale
            ).astype(jnp.bfloat16)
    wk_f = jnp.transpose(wk, (1, 0, 2)).reshape(E, E).astype(jnp.bfloat16)
    wv_f = jnp.transpose(wv, (1, 0, 2)).reshape(E, E).astype(jnp.bfloat16)
    # Final fc, split per concatenated-feature block: (E, E) -> (h, d_k, E).
    fcw3 = fc_w.reshape(h, d_k, E).astype(jnp.bfloat16)
    fcb2 = fc_b.reshape(1, E).astype(jnp.float32)

    b_blk = _pick_batch_block(B, S)
    nb = B // b_blk

    kernel = partial(_mha_kernel, h=h, d_k=d_k, seq=S, b_blk=b_blk)

    grid_spec = pltpu.PrefetchScalarGridSpec(
        num_scalar_prefetch=0,
        grid=(nb,),
        in_specs=[
            pl.BlockSpec((b_blk, S, E), lambda b: (b, 0, 0)),    # query
            pl.BlockSpec((b_blk, S, E), lambda b: (b, 0, 0)),    # key
            pl.BlockSpec((b_blk, S, E), lambda b: (b, 0, 0)),    # value
            pl.BlockSpec((E, E), lambda b: (0, 0)),              # fused Wq (scaled)
            pl.BlockSpec((E, E), lambda b: (0, 0)),              # fused Wk
            pl.BlockSpec((E, E), lambda b: (0, 0)),              # fused Wv
            pl.BlockSpec((h, d_k, E), lambda b: (0, 0, 0)),      # fc weight per head
            pl.BlockSpec((1, E), lambda b: (0, 0)),              # fc bias
        ],
        out_specs=pl.BlockSpec((b_blk, S, E), lambda b: (b, 0, 0)),
    )

    return pl.pallas_call(
        kernel,
        out_shape=jax.ShapeDtypeStruct((B, S, E), query.dtype),
        grid_spec=grid_spec,
        compiler_params=pltpu.CompilerParams(
            dimension_semantics=("parallel",)),
    )(query, key, value, wq_f, wk_f, wv_f, fcw3, fcb2)


def _reference(query, key, value, wq, wk, wv, fc_w, fc_b, *, h):
    """Pure-JAX f32 replica of the PyTorch forward (correctness check)."""
    d_k = wq.shape[-1]
    outs = []
    for hd in range(h):
        Q = query @ wq[hd]
        K = key @ wk[hd]
        V = value @ wv[hd]
        s = (Q @ jnp.swapaxes(K, -2, -1)) / math.sqrt(d_k)
        p = jax.nn.softmax(s, axis=-1)
        outs.append(p @ V)
    cat = jnp.concatenate(outs, axis=-1)
    return cat @ fc_w + fc_b


if __name__ == "__main__":
    B, S, E, H = 2, 8, 32, 8
    d_k = E // H

    key0 = jax.random.PRNGKey(0)
    ks = jax.random.split(key0, 8)

    query = jax.random.normal(ks[0], (B, S, E), dtype=jnp.float32)
    key_in = jax.random.normal(ks[1], (B, S, E), dtype=jnp.float32)
    value = jax.random.normal(ks[2], (B, S, E), dtype=jnp.float32)

    # Deterministic synthetic parameters (shapes follow the module __init__),
    # stored already transposed relative to torch.nn.Linear.weight.
    wq = jax.random.normal(ks[3], (H, E, d_k), dtype=jnp.float32) * 0.1
    wk = jax.random.normal(ks[4], (H, E, d_k), dtype=jnp.float32) * 0.1
    wv = jax.random.normal(ks[5], (H, E, d_k), dtype=jnp.float32) * 0.1
    fc_w = jax.random.normal(ks[6], (E, E), dtype=jnp.float32) * 0.1
    fc_b = jax.random.normal(ks[7], (E,), dtype=jnp.float32) * 0.1

    out = multi_head_attention(query, key_in, value, wq, wk, wv, fc_w, fc_b, h=H)
    out = jax.block_until_ready(out)

    ref = _reference(query, key_in, value, wq, wk, wv, fc_w, fc_b, h=H)
    assert out.shape == (B, S, E)
    # Tolerance accounts for bf16 MXU operands (f32 accumulation), the folded
    # 1/sqrt(d_k) scale, and the approx EUP reciprocal in the softmax.
    assert jnp.allclose(out, ref, atol=2e-2, rtol=2e-2), "mismatch vs reference"

    print("KERNEL_OK")
</pallas_src>

<mosaic_0001>
module attributes {stable_mosaic.version = 11 : i64} {
  func.func @_mha_kernel(%arg0: i32, %arg1: memref<2x8x32xf32, #tpu.memory_space<vmem>>, %arg2: memref<2x8x32xf32, #tpu.memory_space<vmem>>, %arg3: memref<2x8x32xf32, #tpu.memory_space<vmem>>, %arg4: memref<32x32xbf16, #tpu.memory_space<vmem>>, %arg5: memref<32x32xbf16, #tpu.memory_space<vmem>>, %arg6: memref<32x32xbf16, #tpu.memory_space<vmem>>, %arg7: memref<8x4x32xbf16, #tpu.memory_space<vmem>>, %arg8: memref<1x32xf32, #tpu.memory_space<vmem>>, %arg9: memref<2x8x32xf32, #tpu.memory_space<vmem>>) attributes {dimension_semantics = [#tpu.dimension_semantics<parallel>], iteration_bounds = array<i64: 1>, scalar_prefetch = 0 : i64, scratch_operands = 0 : i64, tpu.core_type = #tpu.core_type<tc>, window_params = [{transform_indices = @transform_0, window_bounds = array<i64: 2, 8, 32>}, {transform_indices = @transform_1, window_bounds = array<i64: 2, 8, 32>}, {transform_indices = @transform_2, window_bounds = array<i64: 2, 8, 32>}, {pipeline_mode = #tpu.pipeline_mode<synchronous>, transform_indices = @transform_3, window_bounds = array<i64: 32, 32>}, {pipeline_mode = #tpu.pipeline_mode<synchronous>, transform_indices = @transform_4, window_bounds = array<i64: 32, 32>}, {pipeline_mode = #tpu.pipeline_mode<synchronous>, transform_indices = @transform_5, window_bounds = array<i64: 32, 32>}, {pipeline_mode = #tpu.pipeline_mode<synchronous>, transform_indices = @transform_6, window_bounds = array<i64: 8, 4, 32>}, {pipeline_mode = #tpu.pipeline_mode<synchronous>, transform_indices = @transform_7, window_bounds = array<i64: 1, 32>}, {transform_indices = @transform_8, window_bounds = array<i64: 2, 8, 32>}]} {
    %c0 = arith.constant 0 : index
    %c0_0 = arith.constant 0 : index
    %c0_1 = arith.constant 0 : index
    %0 = vector.load %arg1[%c0, %c0_0, %c0_1] : memref<2x8x32xf32, #tpu.memory_space<vmem>>, vector<2x8x32xf32>
    %1 = vector.shape_cast %0 : vector<2x8x32xf32> to vector<16x32xf32>
    %2 = arith.truncf %1 : vector<16x32xf32> to vector<16x32xbf16>
    %c0_2 = arith.constant 0 : index
    %c0_3 = arith.constant 0 : index
    %c0_4 = arith.constant 0 : index
    %3 = vector.load %arg2[%c0_2, %c0_3, %c0_4] : memref<2x8x32xf32, #tpu.memory_space<vmem>>, vector<2x8x32xf32>
    %4 = vector.shape_cast %3 : vector<2x8x32xf32> to vector<16x32xf32>
    %5 = arith.truncf %4 : vector<16x32xf32> to vector<16x32xbf16>
    %c0_5 = arith.constant 0 : index
    %c0_6 = arith.constant 0 : index
    %c0_7 = arith.constant 0 : index
    %6 = vector.load %arg3[%c0_5, %c0_6, %c0_7] : memref<2x8x32xf32, #tpu.memory_space<vmem>>, vector<2x8x32xf32>
    %7 = vector.shape_cast %6 : vector<2x8x32xf32> to vector<16x32xf32>
    %8 = arith.truncf %7 : vector<16x32xf32> to vector<16x32xbf16>
    %c0_8 = arith.constant 0 : index
    %c0_9 = arith.constant 0 : index
    %9 = vector.load %arg4[%c0_8, %c0_9] : memref<32x32xbf16, #tpu.memory_space<vmem>>, vector<32x32xbf16>
    %cst = arith.constant dense<0.000000e+00> : vector<16x32xf32>
    %10 = tpu.matmul %2, %9, %cst {dimension_numbers = #tpu.dot_dimension_numbers<[1], [0], [0], [1], [0, 0, 1, 1], [], []>} : vector<16x32xbf16>, vector<32x32xbf16>, vector<16x32xf32> -> vector<16x32xf32>
    %c0_10 = arith.constant 0 : index
    %c0_11 = arith.constant 0 : index
    %11 = vector.load %arg5[%c0_10, %c0_11] : memref<32x32xbf16, #tpu.memory_space<vmem>>, vector<32x32xbf16>
    %cst_12 = arith.constant dense<0.000000e+00> : vector<16x32xf32>
    %12 = tpu.matmul %5, %11, %cst_12 {dimension_numbers = #tpu.dot_dimension_numbers<[1], [0], [0], [1], [0, 0, 1, 1], [], []>} : vector<16x32xbf16>, vector<32x32xbf16>, vector<16x32xf32> -> vector<16x32xf32>
    %c0_13 = arith.constant 0 : index
    %c0_14 = arith.constant 0 : index
    %13 = vector.load %arg6[%c0_13, %c0_14] : memref<32x32xbf16, #tpu.memory_space<vmem>>, vector<32x32xbf16>
    %cst_15 = arith.constant dense<0.000000e+00> : vector<16x32xf32>
    %14 = tpu.matmul %8, %13, %cst_15 {dimension_numbers = #tpu.dot_dimension_numbers<[1], [0], [0], [1], [0, 0, 1, 1], [], []>} : vector<16x32xbf16>, vector<32x32xbf16>, vector<16x32xf32> -> vector<16x32xf32>
    %15 = vector.shape_cast %10 : vector<16x32xf32> to vector<2x8x32xf32>
    %16 = vector.extract_strided_slice %15 {offsets = [0, 0, 0], sizes = [2, 8, 4], strides = [1, 1, 1]} : vector<2x8x32xf32> to vector<2x8x4xf32>
    %17 = vector.extract_strided_slice %15 {offsets = [0, 0, 4], sizes = [2, 8, 4], strides = [1, 1, 1]} : vector<2x8x32xf32> to vector<2x8x4xf32>
    %18 = vector.extract_strided_slice %15 {offsets = [0, 0, 8], sizes = [2, 8, 4], strides = [1, 1, 1]} : vector<2x8x32xf32> to vector<2x8x4xf32>
    %19 = vector.extract_strided_slice %15 {offsets = [0, 0, 12], sizes = [2, 8, 4], strides = [1, 1, 1]} : vector<2x8x32xf32> to vector<2x8x4xf32>
    %20 = vector.extract_strided_slice %15 {offsets = [0, 0, 16], sizes = [2, 8, 4], strides = [1, 1, 1]} : vector<2x8x32xf32> to vector<2x8x4xf32>
    %21 = vector.extract_strided_slice %15 {offsets = [0, 0, 20], sizes = [2, 8, 4], strides = [1, 1, 1]} : vector<2x8x32xf32> to vector<2x8x4xf32>
    %22 = vector.extract_strided_slice %15 {offsets = [0, 0, 24], sizes = [2, 8, 4], strides = [1, 1, 1]} : vector<2x8x32xf32> to vector<2x8x4xf32>
    %23 = vector.extract_strided_slice %15 {offsets = [0, 0, 28], sizes = [2, 8, 4], strides = [1, 1, 1]} : vector<2x8x32xf32> to vector<2x8x4xf32>
    %24 = vector.shape_cast %16 : vector<2x8x4xf32> to vector<1x2x8x4xf32>
    %25 = vector.shape_cast %17 : vector<2x8x4xf32> to vector<1x2x8x4xf32>
    %26 = vector.shape_cast %18 : vector<2x8x4xf32> to vector<1x2x8x4xf32>
    %27 = vector.shape_cast %19 : vector<2x8x4xf32> to vector<1x2x8x4xf32>
    %28 = vector.shape_cast %20 : vector<2x8x4xf32> to vector<1x2x8x4xf32>
    %29 = vector.shape_cast %21 : vector<2x8x4xf32> to vector<1x2x8x4xf32>
    %30 = vector.shape_cast %22 : vector<2x8x4xf32> to vector<1x2x8x4xf32>
    %31 = vector.shape_cast %23 : vector<2x8x4xf32> to vector<1x2x8x4xf32>
    %32 = tpu.concatenate %24, %25, %26, %27, %28, %29, %30, %31 in 0 : vector<1x2x8x4xf32>, vector<1x2x8x4xf32>, vector<1x2x8x4xf32>, vector<1x2x8x4xf32>, vector<1x2x8x4xf32>, vector<1x2x8x4xf32>, vector<1x2x8x4xf32>, vector<1x2x8x4xf32> -> vector<8x2x8x4xf32>
    %33 = vector.shape_cast %32 : vector<8x2x8x4xf32> to vector<16x8x4xf32>
    %34 = arith.truncf %33 : vector<16x8x4xf32> to vector<16x8x4xbf16>
    %35 = vector.shape_cast %12 : vector<16x32xf32> to vector<2x8x32xf32>
    %36 = vector.extract_strided_slice %35 {offsets = [0, 0, 0], sizes = [2, 8, 4], strides = [1, 1, 1]} : vector<2x8x32xf32> to vector<2x8x4xf32>
    %37 = vector.extract_strided_slice %35 {offsets = [0, 0, 4], sizes = [2, 8, 4], strides = [1, 1, 1]} : vector<2x8x32xf32> to vector<2x8x4xf32>
    %38 = vector.extract_strided_slice %35 {offsets = [0, 0, 8], sizes = [2, 8, 4], strides = [1, 1, 1]} : vector<2x8x32xf32> to vector<2x8x4xf32>
    %39 = vector.extract_strided_slice %35 {offsets = [0, 0, 12], sizes = [2, 8, 4], strides = [1, 1, 1]} : vector<2x8x32xf32> to vector<2x8x4xf32>
    %40 = vector.extract_strided_slice %35 {offsets = [0, 0, 16], sizes = [2, 8, 4], strides = [1, 1, 1]} : vector<2x8x32xf32> to vector<2x8x4xf32>
    %41 = vector.extract_strided_slice %35 {offsets = [0, 0, 20], sizes = [2, 8, 4], strides = [1, 1, 1]} : vector<2x8x32xf32> to vector<2x8x4xf32>
    %42 = vector.extract_strided_slice %35 {offsets = [0, 0, 24], sizes = [2, 8, 4], strides = [1, 1, 1]} : vector<2x8x32xf32> to vector<2x8x4xf32>
    %43 = vector.extract_strided_slice %35 {offsets = [0, 0, 28], sizes = [2, 8, 4], strides = [1, 1, 1]} : vector<2x8x32xf32> to vector<2x8x4xf32>
    %44 = vector.shape_cast %36 : vector<2x8x4xf32> to vector<1x2x8x4xf32>
    %45 = vector.shape_cast %37 : vector<2x8x4xf32> to vector<1x2x8x4xf32>
    %46 = vector.shape_cast %38 : vector<2x8x4xf32> to vector<1x2x8x4xf32>
    %47 = vector.shape_cast %39 : vector<2x8x4xf32> to vector<1x2x8x4xf32>
    %48 = vector.shape_cast %40 : vector<2x8x4xf32> to vector<1x2x8x4xf32>
    %49 = vector.shape_cast %41 : vector<2x8x4xf32> to vector<1x2x8x4xf32>
    %50 = vector.shape_cast %42 : vector<2x8x4xf32> to vector<1x2x8x4xf32>
    %51 = vector.shape_cast %43 : vector<2x8x4xf32> to vector<1x2x8x4xf32>
    %52 = tpu.concatenate %44, %45, %46, %47, %48, %49, %50, %51 in 0 : vector<1x2x8x4xf32>, vector<1x2x8x4xf32>, vector<1x2x8x4xf32>, vector<1x2x8x4xf32>, vector<1x2x8x4xf32>, vector<1x2x8x4xf32>, vector<1x2x8x4xf32>, vector<1x2x8x4xf32> -> vector<8x2x8x4xf32>
    %53 = vector.shape_cast %52 : vector<8x2x8x4xf32> to vector<16x8x4xf32>
    %54 = arith.truncf %53 : vector<16x8x4xf32> to vector<16x8x4xbf16>
    %55 = vector.shape_cast %14 : vector<16x32xf32> to vector<2x8x32xf32>
    %56 = vector.extract_strided_slice %55 {offsets = [0, 0, 0], sizes = [2, 8, 4], strides = [1, 1, 1]} : vector<2x8x32xf32> to vector<2x8x4xf32>
    %57 = vector.extract_strided_slice %55 {offsets = [0, 0, 4], sizes = [2, 8, 4], strides = [1, 1, 1]} : vector<2x8x32xf32> to vector<2x8x4xf32>
    %58 = vector.extract_strided_slice %55 {offsets = [0, 0, 8], sizes = [2, 8, 4], strides = [1, 1, 1]} : vector<2x8x32xf32> to vector<2x8x4xf32>
    %59 = vector.extract_strided_slice %55 {offsets = [0, 0, 12], sizes = [2, 8, 4], strides = [1, 1, 1]} : vector<2x8x32xf32> to vector<2x8x4xf32>
    %60 = vector.extract_strided_slice %55 {offsets = [0, 0, 16], sizes = [2, 8, 4], strides = [1, 1, 1]} : vector<2x8x32xf32> to vector<2x8x4xf32>
    %61 = vector.extract_strided_slice %55 {offsets = [0, 0, 20], sizes = [2, 8, 4], strides = [1, 1, 1]} : vector<2x8x32xf32> to vector<2x8x4xf32>
    %62 = vector.extract_strided_slice %55 {offsets = [0, 0, 24], sizes = [2, 8, 4], strides = [1, 1, 1]} : vector<2x8x32xf32> to vector<2x8x4xf32>
    %63 = vector.extract_strided_slice %55 {offsets = [0, 0, 28], sizes = [2, 8, 4], strides = [1, 1, 1]} : vector<2x8x32xf32> to vector<2x8x4xf32>
    %64 = vector.shape_cast %56 : vector<2x8x4xf32> to vector<1x2x8x4xf32>
    %65 = vector.shape_cast %57 : vector<2x8x4xf32> to vector<1x2x8x4xf32>
    %66 = vector.shape_cast %58 : vector<2x8x4xf32> to vector<1x2x8x4xf32>
    %67 = vector.shape_cast %59 : vector<2x8x4xf32> to vector<1x2x8x4xf32>
    %68 = vector.shape_cast %60 : vector<2x8x4xf32> to vector<1x2x8x4xf32>
    %69 = vector.shape_cast %61 : vector<2x8x4xf32> to vector<1x2x8x4xf32>
    %70 = vector.shape_cast %62 : vector<2x8x4xf32> to vector<1x2x8x4xf32>
    %71 = vector.shape_cast %63 : vector<2x8x4xf32> to vector<1x2x8x4xf32>
    %72 = tpu.concatenate %64, %65, %66, %67, %68, %69, %70, %71 in 0 : vector<1x2x8x4xf32>, vector<1x2x8x4xf32>, vector<1x2x8x4xf32>, vector<1x2x8x4xf32>, vector<1x2x8x4xf32>, vector<1x2x8x4xf32>, vector<1x2x8x4xf32>, vector<1x2x8x4xf32> -> vector<8x2x8x4xf32>
    %73 = vector.shape_cast %72 : vector<8x2x8x4xf32> to vector<16x8x4xf32>
    %74 = arith.truncf %73 : vector<16x8x4xf32> to vector<16x8x4xbf16>
    "tpu.trace_start"() <{level = 10 : i32, message = "bqd,bkd->bqk"}> : () -> ()
    %cst_16 = arith.constant dense<0.000000e+00> : vector<16x8x8xf32>
    %75 = tpu.matmul %34, %54, %cst_16 {dimension_numbers = #tpu.dot_dimension_numbers<[2], [2], [1], [1], [0, 0, 0, 1, 1, 1], [0], [0]>} : vector<16x8x4xbf16>, vector<16x8x4xbf16>, vector<16x8x8xf32> -> vector<16x8x8xf32>
    "tpu.trace_stop"() : () -> ()
    %cst_17 = arith.constant dense<0xFF800000> : vector<16x8xf32>
    %76 = vector.multi_reduction <maximumf>, %75, %cst_17 [2] : vector<16x8x8xf32> to vector<16x8xf32>
    %77 = vector.shape_cast %76 : vector<16x8xf32> to vector<16x8x1xf32>
    %78 = vector.broadcast %77 : vector<16x8x1xf32> to vector<16x8x8xf32>
    %79 = arith.subf %75, %78 : vector<16x8x8xf32>
    %80 = math.exp %79 : vector<16x8x8xf32>
    %cst_18 = arith.constant dense<0.000000e+00> : vector<16x8xf32>
    %81 = vector.multi_reduction <add>, %80, %cst_18 [2] : vector<16x8x8xf32> to vector<16x8xf32>
    %82 = vector.shape_cast %81 : vector<16x8xf32> to vector<16x8x1xf32>
    %83 = tpu.reciprocal %82 {approx = true} : vector<16x8x1xf32> -> vector<16x8x1xf32>
    %84 = vector.broadcast %83 : vector<16x8x1xf32> to vector<16x8x8xf32>
    %85 = arith.mulf %80, %84 : vector<16x8x8xf32>
    %86 = arith.truncf %85 : vector<16x8x8xf32> to vector<16x8x8xbf16>
    "tpu.trace_start"() <{level = 10 : i32, message = "bqk,bkd->bqd"}> : () -> ()
    %cst_19 = arith.constant dense<0.000000e+00> : vector<16x8x4xf32>
    %87 = tpu.matmul %86, %74, %cst_19 {dimension_numbers = #tpu.dot_dimension_numbers<[2], [1], [1], [2], [0, 0, 0, 1, 1, 2], [0], [0]>} : vector<16x8x8xbf16>, vector<16x8x4xbf16>, vector<16x8x4xf32> -> vector<16x8x4xf32>
    "tpu.trace_stop"() : () -> ()
    %88 = arith.truncf %87 : vector<16x8x4xf32> to vector<16x8x4xbf16>
    %89 = vector.shape_cast %88 : vector<16x8x4xbf16> to vector<8x16x4xbf16>
    %c0_20 = arith.constant 0 : index
    %c0_21 = arith.constant 0 : index
    %c0_22 = arith.constant 0 : index
    %90 = vector.load %arg7[%c0_20, %c0_21, %c0_22] : memref<8x4x32xbf16, #tpu.memory_space<vmem>>, vector<8x4x32xbf16>
    "tpu.trace_start"() <{level = 10 : i32, message = "hmd,hde->hme"}> : () -> ()
    %cst_23 = arith.constant dense<0.000000e+00> : vector<8x16x32xf32>
    %91 = tpu.matmul %89, %90, %cst_23 {dimension_numbers = #tpu.dot_dimension_numbers<[2], [1], [1], [2], [0, 0, 0, 1, 1, 2], [0], [0]>} : vector<8x16x4xbf16>, vector<8x4x32xbf16>, vector<8x16x32xf32> -> vector<8x16x32xf32>
    "tpu.trace_stop"() : () -> ()
    %cst_24 = arith.constant dense<0.000000e+00> : vector<16x32xf32>
    %92 = vector.multi_reduction <add>, %91, %cst_24 [0] : vector<8x16x32xf32> to vector<16x32xf32>
    %c0_25 = arith.constant 0 : index
    %c0_26 = arith.constant 0 : index
    %93 = vector.load %arg8[%c0_25, %c0_26] : memref<1x32xf32, #tpu.memory_space<vmem>>, vector<1x32xf32>
    %94 = vector.broadcast %93 : vector<1x32xf32> to vector<16x32xf32>
    %95 = arith.addf %92, %94 : vector<16x32xf32>
    %96 = vector.shape_cast %95 : vector<16x32xf32> to vector<2x8x32xf32>
    %c0_27 = arith.constant 0 : index
    %c0_28 = arith.constant 0 : index
    %c0_29 = arith.constant 0 : index
    %97 = vector.load %arg9[%c0_27, %c0_28, %c0_29] : memref<2x8x32xf32, #tpu.memory_space<vmem>>, vector<2x8x32xf32>
    tpu.vector_store %arg9[%c0_27, %c0_28, %c0_29], %96 {strides = array<i32>} : memref<2x8x32xf32, #tpu.memory_space<vmem>>, vector<2x8x32xf32>,
    return
  }
  func.func @transform_0(%arg0: i32) -> (i32, i32, i32) {
    %c0_i32 = arith.constant 0 : i32
    %c0_i32_0 = arith.constant 0 : i32
    %c0_i32_1 = arith.constant 0 : i32
    return %arg0, %c0_i32, %c0_i32_0 : i32, i32, i32
  }
  func.func @transform_1(%arg0: i32) -> (i32, i32, i32) {
    %c0_i32 = arith.constant 0 : i32
    %c0_i32_0 = arith.constant 0 : i32
    %c0_i32_1 = arith.constant 0 : i32
    return %arg0, %c0_i32, %c0_i32_0 : i32, i32, i32
  }
  func.func @transform_2(%arg0: i32) -> (i32, i32, i32) {
    %c0_i32 = arith.constant 0 : i32
    %c0_i32_0 = arith.constant 0 : i32
    %c0_i32_1 = arith.constant 0 : i32
    return %arg0, %c0_i32, %c0_i32_0 : i32, i32, i32
  }
  func.func @transform_3(%arg0: i32) -> (i32, i32) {
    %c0_i32 = arith.constant 0 : i32
    %c0_i32_0 = arith.constant 0 : i32
    %c0_i32_1 = arith.constant 0 : i32
    return %c0_i32, %c0_i32_0 : i32, i32
  }
  func.func @transform_4(%arg0: i32) -> (i32, i32) {
    %c0_i32 = arith.constant 0 : i32
    %c0_i32_0 = arith.constant 0 : i32
    %c0_i32_1 = arith.constant 0 : i32
    return %c0_i32, %c0_i32_0 : i32, i32
  }
  func.func @transform_5(%arg0: i32) -> (i32, i32) {
    %c0_i32 = arith.constant 0 : i32
    %c0_i32_0 = arith.constant 0 : i32
    %c0_i32_1 = arith.constant 0 : i32
    return %c0_i32, %c0_i32_0 : i32, i32
  }
  func.func @transform_6(%arg0: i32) -> (i32, i32, i32) {
    %c0_i32 = arith.constant 0 : i32
    %c0_i32_0 = arith.constant 0 : i32
    %c0_i32_1 = arith.constant 0 : i32
    %c0_i32_2 = arith.constant 0 : i32
    return %c0_i32, %c0_i32_0, %c0_i32_1 : i32, i32, i32
  }
  func.func @transform_7(%arg0: i32) -> (i32, i32) {
    %c0_i32 = arith.constant 0 : i32
    %c0_i32_0 = arith.constant 0 : i32
    %c0_i32_1 = arith.constant 0 : i32
    return %c0_i32, %c0_i32_0 : i32, i32
  }
  func.func @transform_8(%arg0: i32) -> (i32, i32, i32) {
    %c0_i32 = arith.constant 0 : i32
    %c0_i32_0 = arith.constant 0 : i32
    %c0_i32_1 = arith.constant 0 : i32
    return %arg0, %c0_i32, %c0_i32_0 : i32, i32, i32
  }
}

</mosaic_0001>

<llo_original>
// kernel: tpu_custom_call.1
$region0: #{tpu_custom_call.1}
  #allocation0 [shape = 'u32[]', space=smem, size = 0x4, offset = 0x4, fixed_abs, tag = 'smem constant byte address 0x4 - core index']
  #allocation1 [shape = 'u32[144,128]{1,0:T(1,128)}', space=vmem, size = 0x12000, scoped, tag = 'internal scratch']
  %s0 = inlined_call_operand.hbm [shape: f32[2,8,32], index: 0, kind: input, shape index: {}]
  %s1 = inlined_call_operand.hbm [shape: f32[2,8,32], index: 1, kind: input, shape index: {}]
  %s2 = inlined_call_operand.hbm [shape: f32[2,8,32], index: 2, kind: input, shape index: {}]
  %s3 = inlined_call_operand.hbm [shape: bf16[32,32], index: 3, kind: input, shape index: {}]
  %s4 = inlined_call_operand.hbm [shape: bf16[32,32], index: 4, kind: input, shape index: {}]
  %s5 = inlined_call_operand.hbm [shape: bf16[32,32], index: 5, kind: input, shape index: {}]
  %s6 = inlined_call_operand.hbm [shape: bf16[8,4,32], index: 6, kind: input, shape index: {}]
  %s7 = inlined_call_operand.vmem [shape: f32[1,32], index: 7, kind: input, shape index: {}]
  %s8 = inlined_call_operand.hbm [shape: f32[2,8,32], index: 8, kind: output, shape index: {}]
  %s9 = sld [smem:[#allocation0]]
  $region70: #{tpu_custom_call.1} parent=0
    _
  %s11 = ssub.s32 1, %s9
  %s12 = scalar_select 0, %s11, %s9
  $region1: #{tpu_custom_call.1} parent=0
    #allocation2 [shape = 'u8[8192]{0}', space=vmem, size = 0x2000, scoped, tag = 'input window, operand 0, single buffered']
    #allocation3 [shape = 's32[1]{0}', space=sflag, size = 0x4, scoped, tag = 'scoped memory for tpu_custom_call.1']
    #allocation4 [shape = 's32[1]{0}', space=sflag, size = 0x4, scoped, tag = 'scoped memory for tpu_custom_call.1']
    #allocation5 [shape = 'u8[8192]{0}', space=vmem, size = 0x2000, scoped, tag = 'input window, operand 1, single buffered']
    #allocation6 [shape = 's32[1]{0}', space=sflag, size = 0x4, scoped, tag = 'scoped memory for tpu_custom_call.1']
    #allocation7 [shape = 'u8[8192]{0}', space=vmem, size = 0x2000, scoped, tag = 'input window, operand 2, single buffered']
    #allocation8 [shape = 'u8[8192]{0}', space=vmem, size = 0x2000, scoped, tag = 'input window, operand 3, single buffered']
    #allocation9 [shape = 's32[1]{0}', space=sflag, size = 0x4, scoped, tag = 'scoped memory for tpu_custom_call.1']
    #allocation10 [shape = 'u8[8192]{0}', space=vmem, size = 0x2000, scoped, tag = 'input window, operand 4, single buffered']
    #allocation11 [shape = 'u8[8192]{0}', space=vmem, size = 0x2000, scoped, tag = 'input window, operand 5, single buffered']
    #allocation12 [shape = 's32[1]{0}', space=sflag, size = 0x4, scoped, tag = 'scoped memory for tpu_custom_call.1']
    #allocation13 [shape = 'u8[8192]{0}', space=vmem, size = 0x2000, scoped, tag = 'input window, operand 6, single buffered']
    #allocation14 [shape = 'u8[8192]{0}', space=vmem, size = 0x2000, scoped, tag = 'output window, operand 0, single buffered']
    %13 = vsyncpa [#allocation3], 0
    %14 = vsyncpa [#allocation6], 0
    %15 = vsyncpa [#allocation9], 0
    %16 = vsyncpa [#allocation12], 0
    %17 = vsyncpa [#allocation4], 0
    // Predicated region
    $region2: #{tpu_custom_call.1} parent=1 // pred_check
      _
    $region3: #{tpu_custom_call.1} parent=1 // pred_check_branch
      %19 = sbr.rel (0) target = $region5
    $region4: #{tpu_custom_call.1} parent=1 // pred_region
      %s21 = ssub.s32 256, 256
      %22 = vsyncadd [#allocation3], %s21
      %s23 = sshll.u32 [#allocation2], 4
      %s24 = int_to_ptr.vmem [resolvable:$true] %s23
      %29 = dma.hbm_to_vmem [thread:$0]  %s0, 256, %s24, [#allocation3], 128, 128, 8
    $region5: #{tpu_custom_call.1} parent=1 // pred_fallthru
      _
    // Predicated region
    $region6: #{tpu_custom_call.1} parent=1 // pred_check
      _
    $region7: #{tpu_custom_call.1} parent=1 // pred_check_branch
      %31 = sbr.rel (0) target = $region9
    $region8: #{tpu_custom_call.1} parent=1 // pred_region
      %s33 = ssub.s32 256, 256
      %34 = vsyncadd [#allocation6], %s33
      %s35 = sshll.u32 [#allocation5], 4
      %s36 = int_to_ptr.vmem [resolvable:$true] %s35
      %41 = dma.hbm_to_vmem [thread:$0]  %s1, 256, %s36, [#allocation6], 128, 128, 8
    $region9: #{tpu_custom_call.1} parent=1 // pred_fallthru
      _
    // Predicated region
    $region10: #{tpu_custom_call.1} parent=1 // pred_check
      _
    $region11: #{tpu_custom_call.1} parent=1 // pred_check_branch
      %43 = sbr.rel (0) target = $region13
    $region12: #{tpu_custom_call.1} parent=1 // pred_region
      %s45 = ssub.s32 256, 256
      %46 = vsyncadd [#allocation6], %s45
      %s47 = sshll.u32 [#allocation7], 4
      %s48 = int_to_ptr.vmem [resolvable:$true] %s47
      %53 = dma.hbm_to_vmem [thread:$0]  %s2, 256, %s48, [#allocation6], 128, 128, 8
    $region13: #{tpu_custom_call.1} parent=1 // pred_fallthru
      _
    // Predicated region
    $region14: #{tpu_custom_call.1} parent=1 // pred_check
      _
    $region15: #{tpu_custom_call.1} parent=1 // pred_check_branch
      %55 = sbr.rel (0) target = $region17
    $region16: #{tpu_custom_call.1} parent=1 // pred_region
      %s57 = ssub.s32 256, 256
      %58 = vsyncadd [#allocation9], %s57
      %s59 = sshll.u32 [#allocation8], 4
      %s60 = int_to_ptr.vmem [resolvable:$true] %s59
      %65 = dma.hbm_to_vmem [thread:$0]  %s3, 256, %s60, [#allocation9], 64, 64, 4
    $region17: #{tpu_custom_call.1} parent=1 // pred_fallthru
      _
    // Predicated region
    $region18: #{tpu_custom_call.1} parent=1 // pred_check
      _
    $region19: #{tpu_custom_call.1} parent=1 // pred_check_branch
      %67 = sbr.rel (0) target = $region21
    $region20: #{tpu_custom_call.1} parent=1 // pred_region
      %s69 = ssub.s32 256, 256
      %70 = vsyncadd [#allocation9], %s69
      %s71 = sshll.u32 [#allocation10], 4
      %s72 = int_to_ptr.vmem [resolvable:$true] %s71
      %77 = dma.hbm_to_vmem [thread:$0]  %s4, 256, %s72, [#allocation9], 64, 64, 4
    $region21: #{tpu_custom_call.1} parent=1 // pred_fallthru
      _
    // Predicated region
    $region22: #{tpu_custom_call.1} parent=1 // pred_check
      _
    $region23: #{tpu_custom_call.1} parent=1 // pred_check_branch
      %79 = sbr.rel (0) target = $region25
    $region24: #{tpu_custom_call.1} parent=1 // pred_region
      %s81 = ssub.s32 256, 256
      %82 = vsyncadd [#allocation12], %s81
      %s83 = sshll.u32 [#allocation11], 4
      %s84 = int_to_ptr.vmem [resolvable:$true] %s83
      %89 = dma.hbm_to_vmem [thread:$0]  %s5, 256, %s84, [#allocation12], 64, 64, 4
    $region25: #{tpu_custom_call.1} parent=1 // pred_fallthru
      _
    // Predicated region
    $region26: #{tpu_custom_call.1} parent=1 // pred_check
      _
    $region27: #{tpu_custom_call.1} parent=1 // pred_check_branch
      %91 = sbr.rel (0) target = $region29
    $region28: #{tpu_custom_call.1} parent=1 // pred_region
      %s93 = ssub.s32 256, 256
      %94 = vsyncadd [#allocation12], %s93
      %s95 = sshll.u32 [#allocation13], 4
      %s96 = int_to_ptr.vmem [resolvable:$true] %s95
      %101 = dma.hbm_to_vmem [thread:$0]  %s6, 256, %s96, [#allocation12], 32, 32, 2
    $region29: #{tpu_custom_call.1} parent=1 // pred_fallthru
      _
    // Predicated region
    $region30: #{tpu_custom_call.1} parent=1 // pred_check
      _
    $region31: #{tpu_custom_call.1} parent=1 // pred_check_branch
      %103 = sbr.rel (0) target = $region33
    $region32: #{tpu_custom_call.1} parent=1 // pred_region
      _
    $region33: #{tpu_custom_call.1} parent=1 // pred_fallthru
      _
    // Predicated region
    $region34: #{tpu_custom_call.1} parent=1 // pred_check
      _
    $region35: #{tpu_custom_call.1} parent=1 // pred_check_branch
      %105 = sbr.rel (0) target = $region37
    $region36: #{tpu_custom_call.1} parent=1 // pred_region
      %106 = dma.done [#allocation3], 256
    $region37: #{tpu_custom_call.1} parent=1 // pred_fallthru
      _
    // Predicated region
    $region38: #{tpu_custom_call.1} parent=1 // pred_check
      _
    $region39: #{tpu_custom_call.1} parent=1 // pred_check_branch
      %108 = sbr.rel (0) target = $region41
    $region40: #{tpu_custom_call.1} parent=1 // pred_region
      %109 = dma.done [#allocation6], 256
    $region41: #{tpu_custom_call.1} parent=1 // pred_fallthru
      _
    // Predicated region
    $region42: #{tpu_custom_call.1} parent=1 // pred_check
      _
    $region43: #{tpu_custom_call.1} parent=1 // pred_check_branch
      %111 = sbr.rel (0) target = $region45
    $region44: #{tpu_custom_call.1} parent=1 // pred_region
      %112 = dma.done [#allocation6], 256
    $region45: #{tpu_custom_call.1} parent=1 // pred_fallthru
      _
    // Predicated region
    $region46: #{tpu_custom_call.1} parent=1 // pred_check
      _
    $region47: #{tpu_custom_call.1} parent=1 // pred_check_branch
      %114 = sbr.rel (0) target = $region49
    $region48: #{tpu_custom_call.1} parent=1 // pred_region
      %115 = dma.done [#allocation9], 256
    $region49: #{tpu_custom_call.1} parent=1 // pred_fallthru
      _
    // Predicated region
    $region50: #{tpu_custom_call.1} parent=1 // pred_check
      _
    $region51: #{tpu_custom_call.1} parent=1 // pred_check_branch
      %117 = sbr.rel (0) target = $region53
    $region52: #{tpu_custom_call.1} parent=1 // pred_region
      %118 = dma.done [#allocation9], 256
    $region53: #{tpu_custom_call.1} parent=1 // pred_fallthru
      _
    // Predicated region
    $region54: #{tpu_custom_call.1} parent=1 // pred_check
      _
    $region55: #{tpu_custom_call.1} parent=1 // pred_check_branch
      %120 = sbr.rel (0) target = $region57
    $region56: #{tpu_custom_call.1} parent=1 // pred_region
      %121 = dma.done [#allocation12], 256
    $region57: #{tpu_custom_call.1} parent=1 // pred_fallthru
      _
    // Predicated region
    $region58: #{tpu_custom_call.1} parent=1 // pred_check
      _
    $region59: #{tpu_custom_call.1} parent=1 // pred_check_branch
      %123 = sbr.rel (0) target = $region61
    $region60: #{tpu_custom_call.1} parent=1 // pred_region
      %124 = dma.done [#allocation12], 256
    $region61: #{tpu_custom_call.1} parent=1 // pred_fallthru
      _
    %v126 = vld [vmem:[#allocation2] sm:$0xff]
    %v127 = vld [vmem:[#allocation2 + $0x8] sm:$0xff]
    %v128 = vpack.c.bf16 %v127, %v126
    %v129 = vld [vmem:[#allocation5] sm:$0xff]
    %v130 = vld [vmem:[#allocation5 + $0x8] sm:$0xff]
    %v131 = vpack.c.bf16 %v130, %v129
    %v132 = vld [vmem:[#allocation7] sm:$0xff]
    %v133 = vld [vmem:[#allocation7 + $0x8] sm:$0xff]
    %v134 = vpack.c.bf16 %v133, %v132
    %v135 = vld [vmem:[#allocation8] sm:$0xf]
    %v136 = vld [vmem:[#allocation8 + $0x4] sm:$0xf]
    %v137 = vld [vmem:[#allocation8 + $0x8] sm:$0xf]
    %v138 = vld [vmem:[#allocation8 + $0xc] sm:$0xf]
    %v143 = vunpack.c.l.b16 %v135
    %v144 = vunpack.c.l.b16 %v136
    %v145 = vunpack.c.l.b16 %v137
    %v146 = vunpack.c.l.b16 %v138
    %v147 = vpack.c.b16 %v144, %v143
    %v148 = vpack.c.b16 %v146, %v145
    %vm151 = vcmask 261120
    %v153 = vsel %vm151, %v128, 0
    %155 = vmatprep.subr.bf16.mxu0 0
    %156 = vmatpush1.bf16.msra.mxu0 0
    %157 = vmatprep.subr.bf16.mxu0 0
    %158 = vmatpush1.bf16.msra.mxu0 0
    %159 = vmatprep.subr.bf16.mxu0 0
    %160 = vmatpush1.bf16.msra.mxu0 0
    %161 = vmatprep.subr.bf16.mxu0 0
    %162 = vmatpush1.bf16.msra.mxu0 0
    %163 = vmatprep.subr.bf16.mxu0 0
    %164 = vmatpush1.bf16.msra.mxu0 0
    %165 = vmatprep.subr.bf16.mxu0 0
    %166 = vmatpush1.bf16.msra.mxu0 0
    %167 = vmatprep.subr.bf16.mxu0 0
    %168 = vmatpush1.bf16.msra.mxu0 %v148
    %169 = vmatprep.subr.bf16.mxu0 0
    %170 = vmatpush1.bf16.msra.mxu0 %v147
    %171 = vmatprep.subr.bf16.mxu0 0
    %172 = vmatpush2.bf16.msra.mxu0 0
    %173 = vmatprep.subr.bf16.mxu0 0
    %174 = vmatpush2.bf16.msra.mxu0 0
    %175 = vmatprep.subr.bf16.mxu0 0
    %176 = vmatpush2.bf16.msra.mxu0 0
    %177 = vmatprep.subr.bf16.mxu0 0
    %178 = vmatpush2.bf16.msra.mxu0 0
    %179 = vmatprep.subr.bf16.mxu0 0
    %180 = vmatpush2.bf16.msra.mxu0 0
    %181 = vmatprep.subr.bf16.mxu0 0
    %182 = vmatpush2.bf16.msra.mxu0 0
    %183 = vmatprep.subr.bf16.mxu0 0
    %184 = vmatpush2.bf16.msra.mxu0 0
    %185 = vmatprep.subr.bf16.mxu0 0
    %186 = vmatpush2.bf16.msra.mxu0 0
    %187 = vmatprep.mubr.bf16.mxu0 0
    %188 = vmatmul.mubr.bf16.gmra.mxu0 %v153
    %v189 = vpop.f32.mrf.mxu0
    %v190 = vadd.f32 0.0, %v189
    %v191 = vpop.f32.mrf.mxu0
    %v192 = vpop.f32.mrf.mxu0
    %v193 = vadd.f32 0.0, %v192
    %v194 = vpop.f32.mrf.mxu0
    %195 = vdwg.mxu0
    %v196 = vld [vmem:[#allocation10] sm:$0xf]
    %v197 = vld [vmem:[#allocation10 + $0x4] sm:$0xf]
    %v198 = vld [vmem:[#allocation10 + $0x8] sm:$0xf]
    %v199 = vld [vmem:[#allocation10 + $0xc] sm:$0xf]
    %v204 = vunpack.c.l.b16 %v196
    %v205 = vunpack.c.l.b16 %v197
    %v206 = vunpack.c.l.b16 %v198
    %v207 = vunpack.c.l.b16 %v199
    %v208 = vpack.c.b16 %v205, %v204
    %v209 = vpack.c.b16 %v207, %v206
    %v213 = vsel %vm151, %v131, 0
    %215 = vmatprep.subr.bf16.mxu0 0
    %216 = vmatpush1.bf16.msra.mxu0 0
    %217 = vmatprep.subr.bf16.mxu0 0
    %218 = vmatpush1.bf16.msra.mxu0 0
    %219 = vmatprep.subr.bf16.mxu0 0
    %220 = vmatpush1.bf16.msra.mxu0 0
    %221 = vmatprep.subr.bf16.mxu0 0
    %222 = vmatpush1.bf16.msra.mxu0 0
    %223 = vmatprep.subr.bf16.mxu0 0
    %224 = vmatpush1.bf16.msra.mxu0 0
    %225 = vmatprep.subr.bf16.mxu0 0
    %226 = vmatpush1.bf16.msra.mxu0 0
    %227 = vmatprep.subr.bf16.mxu0 0
    %228 = vmatpush1.bf16.msra.mxu0 %v209
    %229 = vmatprep.subr.bf16.mxu0 0
    %230 = vmatpush1.bf16.msra.mxu0 %v208
    %231 = vmatprep.subr.bf16.mxu0 0
    %232 = vmatpush2.bf16.msra.mxu0 0
    %233 = vmatprep.subr.bf16.mxu0 0
    %234 = vmatpush2.bf16.msra.mxu0 0
    %235 = vmatprep.subr.bf16.mxu0 0
    %236 = vmatpush2.bf16.msra.mxu0 0
    %237 = vmatprep.subr.bf16.mxu0 0
    %238 = vmatpush2.bf16.msra.mxu0 0
    %239 = vmatprep.subr.bf16.mxu0 0
    %240 = vmatpush2.bf16.msra.mxu0 0
    %241 = vmatprep.subr.bf16.mxu0 0
    %242 = vmatpush2.bf16.msra.mxu0 0
    %243 = vmatprep.subr.bf16.mxu0 0
    %244 = vmatpush2.bf16.msra.mxu0 0
    %245 = vmatprep.subr.bf16.mxu0 0
    %246 = vmatpush2.bf16.msra.mxu0 0
    %247 = vmatprep.mubr.bf16.mxu0 0
    %248 = vmatmul.mubr.bf16.gmra.mxu0 %v213
    %v249 = vpop.f32.mrf.mxu0
    %v250 = vadd.f32 0.0, %v249
    %v251 = vpop.f32.mrf.mxu0
    %v252 = vpop.f32.mrf.mxu0
    %v253 = vadd.f32 0.0, %v252
    %v254 = vpop.f32.mrf.mxu0
    %255 = vdwg.mxu0
    %v256 = vld [vmem:[#allocation11] sm:$0xf]
    %v257 = vld [vmem:[#allocation11 + $0x4] sm:$0xf]
    %v258 = vld [vmem:[#allocation11 + $0x8] sm:$0xf]
    %v259 = vld [vmem:[#allocation11 + $0xc] sm:$0xf]
    %v264 = vunpack.c.l.b16 %v256
    %v265 = vunpack.c.l.b16 %v257
    %v266 = vunpack.c.l.b16 %v258
    %v267 = vunpack.c.l.b16 %v259
    %v268 = vpack.c.b16 %v265, %v264
    %v269 = vpack.c.b16 %v267, %v266
    %v273 = vsel %vm151, %v134, 0
    %275 = vmatprep.subr.bf16.mxu0 0
    %276 = vmatpush1.bf16.msra.mxu0 0
    %277 = vmatprep.subr.bf16.mxu0 0
    %278 = vmatpush1.bf16.msra.mxu0 0
    %279 = vmatprep.subr.bf16.mxu0 0
    %280 = vmatpush1.bf16.msra.mxu0 0
    %281 = vmatprep.subr.bf16.mxu0 0
    %282 = vmatpush1.bf16.msra.mxu0 0
    %283 = vmatprep.subr.bf16.mxu0 0
    %284 = vmatpush1.bf16.msra.mxu0 0
    %285 = vmatprep.subr.bf16.mxu0 0
    %286 = vmatpush1.bf16.msra.mxu0 0
    %287 = vmatprep.subr.bf16.mxu0 0
    %288 = vmatpush1.bf16.msra.mxu0 %v269
    %289 = vmatprep.subr.bf16.mxu0 0
    %290 = vmatpush1.bf16.msra.mxu0 %v268
    %291 = vmatprep.subr.bf16.mxu0 0
    %292 = vmatpush2.bf16.msra.mxu0 0
    %293 = vmatprep.subr.bf16.mxu0 0
    %294 = vmatpush2.bf16.msra.mxu0 0
    %295 = vmatprep.subr.bf16.mxu0 0
    %296 = vmatpush2.bf16.msra.mxu0 0
    %297 = vmatprep.subr.bf16.mxu0 0
    %298 = vmatpush2.bf16.msra.mxu0 0
    %299 = vmatprep.subr.bf16.mxu0 0
    %300 = vmatpush2.bf16.msra.mxu0 0
    %301 = vmatprep.subr.bf16.mxu0 0
    %302 = vmatpush2.bf16.msra.mxu0 0
    %303 = vmatprep.subr.bf16.mxu0 0
    %304 = vmatpush2.bf16.msra.mxu0 0
    %305 = vmatprep.subr.bf16.mxu0 0
    %306 = vmatpush2.bf16.msra.mxu0 0
    %307 = vmatprep.mubr.bf16.mxu0 0
    %308 = vmatmul.mubr.bf16.gmra.mxu0 %v273
    %v309 = vpop.f32.mrf.mxu0
    %v310 = vadd.f32 0.0, %v309
    %v311 = vpop.f32.mrf.mxu0
    %v312 = vpop.f32.mrf.mxu0
    %v313 = vadd.f32 0.0, %v312
    %v314 = vpop.f32.mrf.mxu0
    %315 = vdwg.mxu0
    %318 = vrot.lane.b32.xlu0 %v190, 124
    %v319 = vpop.permute.xlu0 %318
    %320 = vrot.lane.b32.xlu0 %v193, 124
    %v321 = vpop.permute.xlu0 %320
    %324 = vrot.lane.b32.xlu0 %v190, 120
    %v325 = vpop.permute.xlu0 %324
    %326 = vrot.lane.b32.xlu0 %v193, 120
    %v327 = vpop.permute.xlu0 %326
    %330 = vrot.lane.b32.xlu0 %v190, 116
    %v331 = vpop.permute.xlu0 %330
    %332 = vrot.lane.b32.xlu0 %v193, 116
    %v333 = vpop.permute.xlu0 %332
    %336 = vrot.lane.b32.xlu0 %v190, 112
    %v337 = vpop.permute.xlu0 %336
    %338 = vrot.lane.b32.xlu0 %v193, 112
    %v339 = vpop.permute.xlu0 %338
    %342 = vrot.lane.b32.xlu0 %v190, 108
    %v343 = vpop.permute.xlu0 %342
    %344 = vrot.lane.b32.xlu0 %v193, 108
    %v345 = vpop.permute.xlu0 %344
    %348 = vrot.lane.b32.xlu0 %v190, 104
    %v349 = vpop.permute.xlu0 %348
    %350 = vrot.lane.b32.xlu0 %v193, 104
    %v351 = vpop.permute.xlu0 %350
    %354 = vrot.lane.b32.xlu0 %v190, 100
    %v355 = vpop.permute.xlu0 %354
    %356 = vrot.lane.b32.xlu0 %v193, 100
    %v357 = vpop.permute.xlu0 %356
    %v360 = vpack.c.bf16 %v190, %v190
    %v361 = vpack.c.bf16 %v193, %v193
    %v362 = vpack.c.bf16 %v319, %v319
    %v363 = vpack.c.bf16 %v321, %v321
    %v364 = vpack.c.bf16 %v325, %v325
    %v365 = vpack.c.bf16 %v327, %v327
    %v366 = vpack.c.bf16 %v331, %v331
    %v367 = vpack.c.bf16 %v333, %v333
    %v368 = vpack.c.bf16 %v337, %v337
    %v369 = vpack.c.bf16 %v339, %v339
    %v370 = vpack.c.bf16 %v343, %v343
    %v371 = vpack.c.bf16 %v345, %v345
    %v372 = vpack.c.bf16 %v349, %v349
    %v373 = vpack.c.bf16 %v351, %v351
    %v374 = vpack.c.bf16 %v355, %v355
    %v375 = vpack.c.bf16 %v357, %v357
    %378 = vrot.lane.b32.xlu0 %v250, 124
    %v379 = vpop.permute.xlu0 %378
    %380 = vrot.lane.b32.xlu0 %v253, 124
    %v381 = vpop.permute.xlu0 %380
    %384 = vrot.lane.b32.xlu0 %v250, 120
    %v385 = vpop.permute.xlu0 %384
    %386 = vrot.lane.b32.xlu0 %v253, 120
    %v387 = vpop.permute.xlu0 %386
    %390 = vrot.lane.b32.xlu0 %v250, 116
    %v391 = vpop.permute.xlu0 %390
    %392 = vrot.lane.b32.xlu0 %v253, 116
    %v393 = vpop.permute.xlu0 %392
    %396 = vrot.lane.b32.xlu0 %v250, 112
    %v397 = vpop.permute.xlu0 %396
    %398 = vrot.lane.b32.xlu0 %v253, 112
    %v399 = vpop.permute.xlu0 %398
    %402 = vrot.lane.b32.xlu0 %v250, 108
    %v403 = vpop.permute.xlu0 %402
    %404 = vrot.lane.b32.xlu0 %v253, 108
    %v405 = vpop.permute.xlu0 %404
    %408 = vrot.lane.b32.xlu0 %v250, 104
    %v409 = vpop.permute.xlu0 %408
    %410 = vrot.lane.b32.xlu0 %v253, 104
    %v411 = vpop.permute.xlu0 %410
    %414 = vrot.lane.b32.xlu0 %v250, 100
    %v415 = vpop.permute.xlu0 %414
    %416 = vrot.lane.b32.xlu0 %v253, 100
    %v417 = vpop.permute.xlu0 %416
    %v420 = vpack.c.bf16 %v250, %v250
    %v421 = vpack.c.bf16 %v253, %v253
    %v422 = vpack.c.bf16 %v379, %v379
    %v423 = vpack.c.bf16 %v381, %v381
    %v424 = vpack.c.bf16 %v385, %v385
    %v425 = vpack.c.bf16 %v387, %v387
    %v426 = vpack.c.bf16 %v391, %v391
    %v427 = vpack.c.bf16 %v393, %v393
    %v428 = vpack.c.bf16 %v397, %v397
    %v429 = vpack.c.bf16 %v399, %v399
    %v430 = vpack.c.bf16 %v403, %v403
    %v431 = vpack.c.bf16 %v405, %v405
    %v432 = vpack.c.bf16 %v409, %v409
    %v433 = vpack.c.bf16 %v411, %v411
    %v434 = vpack.c.bf16 %v415, %v415
    %v435 = vpack.c.bf16 %v417, %v417
    %438 = vrot.lane.b32.xlu0 %v310, 124
    %v439 = vpop.permute.xlu0 %438
    %440 = vrot.lane.b32.xlu0 %v313, 124
    %v441 = vpop.permute.xlu0 %440
    %444 = vrot.lane.b32.xlu0 %v310, 120
    %v445 = vpop.permute.xlu0 %444
    %446 = vrot.lane.b32.xlu0 %v313, 120
    %v447 = vpop.permute.xlu0 %446
    %450 = vrot.lane.b32.xlu0 %v310, 116
    %v451 = vpop.permute.xlu0 %450
    %452 = vrot.lane.b32.xlu0 %v313, 116
    %v453 = vpop.permute.xlu0 %452
    %456 = vrot.lane.b32.xlu0 %v310, 112
    %v457 = vpop.permute.xlu0 %456
    %458 = vrot.lane.b32.xlu0 %v313, 112
    %v459 = vpop.permute.xlu0 %458
    %462 = vrot.lane.b32.xlu0 %v310, 108
    %v463 = vpop.permute.xlu0 %462
    %464 = vrot.lane.b32.xlu0 %v313, 108
    %v465 = vpop.permute.xlu0 %464
    %468 = vrot.lane.b32.xlu0 %v310, 104
    %v469 = vpop.permute.xlu0 %468
    %470 = vrot.lane.b32.xlu0 %v313, 104
    %v471 = vpop.permute.xlu0 %470
    %474 = vrot.lane.b32.xlu0 %v310, 100
    %v475 = vpop.permute.xlu0 %474
    %476 = vrot.lane.b32.xlu0 %v313, 100
    %v477 = vpop.permute.xlu0 %476
    %v480 = vpack.c.bf16 %v310, %v310
    %v481 = vpack.c.bf16 %v313, %v313
    %v482 = vpack.c.bf16 %v439, %v439
    %v483 = vpack.c.bf16 %v441, %v441
    %v484 = vpack.c.bf16 %v445, %v445
    %v485 = vpack.c.bf16 %v447, %v447
    %v486 = vpack.c.bf16 %v451, %v451
    %v487 = vpack.c.bf16 %v453, %v453
    %v488 = vpack.c.bf16 %v457, %v457
    %v489 = vpack.c.bf16 %v459, %v459
    %v490 = vpack.c.bf16 %v463, %v463
    %v491 = vpack.c.bf16 %v465, %v465
    %v492 = vpack.c.bf16 %v469, %v469
    %v493 = vpack.c.bf16 %v471, %v471
    %v494 = vpack.c.bf16 %v475, %v475
    %v495 = vpack.c.bf16 %v477, %v477
    %vm496 = vcmask 31744
    %v498 = vsel %vm496, %v360, 0
    %v501 = vsel %vm496, %v420, 0
    %503 = vmatprep.subr.bf16.mxu0 0
    %504 = vmatpush1.bf16.xpose.msra.mxu0 0
    %505 = vmatprep.subr.bf16.mxu0 0
    %506 = vmatpush1.bf16.xpose.msra.mxu0 0
    %507 = vmatprep.subr.bf16.mxu0 0
    %508 = vmatpush1.bf16.xpose.msra.mxu0 0
    %509 = vmatprep.subr.bf16.mxu0 0
    %510 = vmatpush1.bf16.xpose.msra.mxu0 0
    %511 = vmatprep.subr.bf16.mxu0 0
    %512 = vmatpush1.bf16.xpose.msra.mxu0 0
    %513 = vmatprep.subr.bf16.mxu0 0
    %514 = vmatpush1.bf16.xpose.msra.mxu0 0
    %515 = vmatprep.subr.bf16.mxu0 0
    %516 = vmatpush1.bf16.xpose.msra.mxu0 0
    %517 = vmatprep.subr.bf16.mxu0 0
    %518 = vmatpush1.bf16.xpose.msra.mxu0 %v501
    %519 = vmatprep.subr.bf16.mxu0 0
    %520 = vmatpush2.bf16.xpose.msra.mxu0 0
    %521 = vmatprep.subr.bf16.mxu0 0
    %522 = vmatpush2.bf16.xpose.msra.mxu0 0
    %523 = vmatprep.subr.bf16.mxu0 0
    %524 = vmatpush2.bf16.xpose.msra.mxu0 0
    %525 = vmatprep.subr.bf16.mxu0 0
    %526 = vmatpush2.bf16.xpose.msra.mxu0 0
    %527 = vmatprep.subr.bf16.mxu0 0
    %528 = vmatpush2.bf16.xpose.msra.mxu0 0
    %529 = vmatprep.subr.bf16.mxu0 0
    %530 = vmatpush2.bf16.xpose.msra.mxu0 0
    %531 = vmatprep.subr.bf16.mxu0 0
    %532 = vmatpush2.bf16.xpose.msra.mxu0 0
    %533 = vmatprep.subr.bf16.mxu0 0
    %534 = vmatpush2.bf16.xpose.msra.mxu0 0
    %535 = vmatprep.mubr.bf16.mxu0 0
    %536 = vmatmul.mubr.bf16.gmra.mxu0 %v498
    %v537 = vpop.f32.mrf.mxu0
    %v538 = vadd.f32 0.0, %v537
    %v539 = vpop.f32.mrf.mxu0
    %v540 = vpop.f32.mrf.mxu0
    %v541 = vpop.f32.mrf.mxu0
    %542 = vdwg.mxu0
    %v544 = vsel %vm496, %v361, 0
    %v547 = vsel %vm496, %v421, 0
    %549 = vmatprep.subr.bf16.mxu0 0
    %550 = vmatpush1.bf16.xpose.msra.mxu0 0
    %551 = vmatprep.subr.bf16.mxu0 0
    %552 = vmatpush1.bf16.xpose.msra.mxu0 0
    %553 = vmatprep.subr.bf16.mxu0 0
    %554 = vmatpush1.bf16.xpose.msra.mxu0 0
    %555 = vmatprep.subr.bf16.mxu0 0
    %556 = vmatpush1.bf16.xpose.msra.mxu0 0
    %557 = vmatprep.subr.bf16.mxu0 0
    %558 = vmatpush1.bf16.xpose.msra.mxu0 0
    %559 = vmatprep.subr.bf16.mxu0 0
    %560 = vmatpush1.bf16.xpose.msra.mxu0 0
    %561 = vmatprep.subr.bf16.mxu0 0
    %562 = vmatpush1.bf16.xpose.msra.mxu0 0
    %563 = vmatprep.subr.bf16.mxu0 0
    %564 = vmatpush1.bf16.xpose.msra.mxu0 %v547
    %565 = vmatprep.subr.bf16.mxu0 0
    %566 = vmatpush2.bf16.xpose.msra.mxu0 0
    %567 = vmatprep.subr.bf16.mxu0 0
    %568 = vmatpush2.bf16.xpose.msra.mxu0 0
    %569 = vmatprep.subr.bf16.mxu0 0
    %570 = vmatpush2.bf16.xpose.msra.mxu0 0
    %571 = vmatprep.subr.bf16.mxu0 0
    %572 = vmatpush2.bf16.xpose.msra.mxu0 0
    %573 = vmatprep.subr.bf16.mxu0 0
    %574 = vmatpush2.bf16.xpose.msra.mxu0 0
    %575 = vmatprep.subr.bf16.mxu0 0
    %576 = vmatpush2.bf16.xpose.msra.mxu0 0
    %577 = vmatprep.subr.bf16.mxu0 0
    %578 = vmatpush2.bf16.xpose.msra.mxu0 0
    %579 = vmatprep.subr.bf16.mxu0 0
    %580 = vmatpush2.bf16.xpose.msra.mxu0 0
    %581 = vmatprep.mubr.bf16.mxu0 0
    %582 = vmatmul.mubr.bf16.gmra.mxu0 %v544
    %v583 = vpop.f32.mrf.mxu0
    %v584 = vadd.f32 0.0, %v583
    %v585 = vpop.f32.mrf.mxu0
    %v586 = vpop.f32.mrf.mxu0
    %v587 = vpop.f32.mrf.mxu0
    %588 = vdwg.mxu0
    %v590 = vsel %vm496, %v362, 0
    %v593 = vsel %vm496, %v422, 0
    %595 = vmatprep.subr.bf16.mxu0 0
    %596 = vmatpush1.bf16.xpose.msra.mxu0 0
    %597 = vmatprep.subr.bf16.mxu0 0
    %598 = vmatpush1.bf16.xpose.msra.mxu0 0
    %599 = vmatprep.subr.bf16.mxu0 0
    %600 = vmatpush1.bf16.xpose.msra.mxu0 0
    %601 = vmatprep.subr.bf16.mxu0 0
    %602 = vmatpush1.bf16.xpose.msra.mxu0 0
    %603 = vmatprep.subr.bf16.mxu0 0
    %604 = vmatpush1.bf16.xpose.msra.mxu0 0
    %605 = vmatprep.subr.bf16.mxu0 0
    %606 = vmatpush1.bf16.xpose.msra.mxu0 0
    %607 = vmatprep.subr.bf16.mxu0 0
    %608 = vmatpush1.bf16.xpose.msra.mxu0 0
    %609 = vmatprep.subr.bf16.mxu0 0
    %610 = vmatpush1.bf16.xpose.msra.mxu0 %v593
    %611 = vmatprep.subr.bf16.mxu0 0
    %612 = vmatpush2.bf16.xpose.msra.mxu0 0
    %613 = vmatprep.subr.bf16.mxu0 0
    %614 = vmatpush2.bf16.xpose.msra.mxu0 0
    %615 = vmatprep.subr.bf16.mxu0 0
    %616 = vmatpush2.bf16.xpose.msra.mxu0 0
    %617 = vmatprep.subr.bf16.mxu0 0
    %618 = vmatpush2.bf16.xpose.msra.mxu0 0
    %619 = vmatprep.subr.bf16.mxu0 0
    %620 = vmatpush2.bf16.xpose.msra.mxu0 0
    %621 = vmatprep.subr.bf16.mxu0 0
    %622 = vmatpush2.bf16.xpose.msra.mxu0 0
    %623 = vmatprep.subr.bf16.mxu0 0
    %624 = vmatpush2.bf16.xpose.msra.mxu0 0
    %625 = vmatprep.subr.bf16.mxu0 0
    %626 = vmatpush2.bf16.xpose.msra.mxu0 0
    %627 = vmatprep.mubr.bf16.mxu0 0
    %628 = vmatmul.mubr.bf16.gmra.mxu0 %v590
    %v629 = vpop.f32.mrf.mxu0
    %v630 = vadd.f32 0.0, %v629
    %v631 = vpop.f32.mrf.mxu0
    %v632 = vpop.f32.mrf.mxu0
    %v633 = vpop.f32.mrf.mxu0
    %634 = vdwg.mxu0
    %v636 = vsel %vm496, %v363, 0
    %v639 = vsel %vm496, %v423, 0
    %641 = vmatprep.subr.bf16.mxu0 0
    %642 = vmatpush1.bf16.xpose.msra.mxu0 0
    %643 = vmatprep.subr.bf16.mxu0 0
    %644 = vmatpush1.bf16.xpose.msra.mxu0 0
    %645 = vmatprep.subr.bf16.mxu0 0
    %646 = vmatpush1.bf16.xpose.msra.mxu0 0
    %647 = vmatprep.subr.bf16.mxu0 0
    %648 = vmatpush1.bf16.xpose.msra.mxu0 0
    %649 = vmatprep.subr.bf16.mxu0 0
    %650 = vmatpush1.bf16.xpose.msra.mxu0 0
    %651 = vmatprep.subr.bf16.mxu0 0
    %652 = vmatpush1.bf16.xpose.msra.mxu0 0
    %653 = vmatprep.subr.bf16.mxu0 0
    %654 = vmatpush1.bf16.xpose.msra.mxu0 0
    %655 = vmatprep.subr.bf16.mxu0 0
    %656 = vmatpush1.bf16.xpose.msra.mxu0 %v639
    %657 = vmatprep.subr.bf16.mxu0 0
    %658 = vmatpush2.bf16.xpose.msra.mxu0 0
    %659 = vmatprep.subr.bf16.mxu0 0
    %660 = vmatpush2.bf16.xpose.msra.mxu0 0
    %661 = vmatprep.subr.bf16.mxu0 0
    %662 = vmatpush2.bf16.xpose.msra.mxu0 0
    %663 = vmatprep.subr.bf16.mxu0 0
    %664 = vmatpush2.bf16.xpose.msra.mxu0 0
    %665 = vmatprep.subr.bf16.mxu0 0
    %666 = vmatpush2.bf16.xpose.msra.mxu0 0
    %667 = vmatprep.subr.bf16.mxu0 0
    %668 = vmatpush2.bf16.xpose.msra.mxu0 0
    %669 = vmatprep.subr.bf16.mxu0 0
    %670 = vmatpush2.bf16.xpose.msra.mxu0 0
    %671 = vmatprep.subr.bf16.mxu0 0
    %672 = vmatpush2.bf16.xpose.msra.mxu0 0
    %673 = vmatprep.mubr.bf16.mxu0 0
    %674 = vmatmul.mubr.bf16.gmra.mxu0 %v636
    %v675 = vpop.f32.mrf.mxu0
    %v676 = vadd.f32 0.0, %v675
    %v677 = vpop.f32.mrf.mxu0
    %v678 = vpop.f32.mrf.mxu0
    %v679 = vpop.f32.mrf.mxu0
    %680 = vdwg.mxu0
    %v682 = vsel %vm496, %v364, 0
    %v685 = vsel %vm496, %v424, 0
    %687 = vmatprep.subr.bf16.mxu0 0
    %688 = vmatpush1.bf16.xpose.msra.mxu0 0
    %689 = vmatprep.subr.bf16.mxu0 0
    %690 = vmatpush1.bf16.xpose.msra.mxu0 0
    %691 = vmatprep.subr.bf16.mxu0 0
    %692 = vmatpush1.bf16.xpose.msra.mxu0 0
    %693 = vmatprep.subr.bf16.mxu0 0
    %694 = vmatpush1.bf16.xpose.msra.mxu0 0
    %695 = vmatprep.subr.bf16.mxu0 0
    %696 = vmatpush1.bf16.xpose.msra.mxu0 0
    %697 = vmatprep.subr.bf16.mxu0 0
    %698 = vmatpush1.bf16.xpose.msra.mxu0 0
    %699 = vmatprep.subr.bf16.mxu0 0
    %700 = vmatpush1.bf16.xpose.msra.mxu0 0
    %701 = vmatprep.subr.bf16.mxu0 0
    %702 = vmatpush1.bf16.xpose.msra.mxu0 %v685
    %703 = vmatprep.subr.bf16.mxu0 0
    %704 = vmatpush2.bf16.xpose.msra.mxu0 0
    %705 = vmatprep.subr.bf16.mxu0 0
    %706 = vmatpush2.bf16.xpose.msra.mxu0 0
    %707 = vmatprep.subr.bf16.mxu0 0
    %708 = vmatpush2.bf16.xpose.msra.mxu0 0
    %709 = vmatprep.subr.bf16.mxu0 0
    %710 = vmatpush2.bf16.xpose.msra.mxu0 0
    %711 = vmatprep.subr.bf16.mxu0 0
    %712 = vmatpush2.bf16.xpose.msra.mxu0 0
    %713 = vmatprep.subr.bf16.mxu0 0
    %714 = vmatpush2.bf16.xpose.msra.mxu0 0
    %715 = vmatprep.subr.bf16.mxu0 0
    %716 = vmatpush2.bf16.xpose.msra.mxu0 0
    %717 = vmatprep.subr.bf16.mxu0 0
    %718 = vmatpush2.bf16.xpose.msra.mxu0 0
    %719 = vmatprep.mubr.bf16.mxu0 0
    %720 = vmatmul.mubr.bf16.gmra.mxu0 %v682
    %v721 = vpop.f32.mrf.mxu0
    %v722 = vadd.f32 0.0, %v721
    %v723 = vpop.f32.mrf.mxu0
    %v724 = vpop.f32.mrf.mxu0
    %v725 = vpop.f32.mrf.mxu0
    %726 = vdwg.mxu0
    %v728 = vsel %vm496, %v365, 0
    %v731 = vsel %vm496, %v425, 0
    %733 = vmatprep.subr.bf16.mxu0 0
    %734 = vmatpush1.bf16.xpose.msra.mxu0 0
    %735 = vmatprep.subr.bf16.mxu0 0
    %736 = vmatpush1.bf16.xpose.msra.mxu0 0
    %737 = vmatprep.subr.bf16.mxu0 0
    %738 = vmatpush1.bf16.xpose.msra.mxu0 0
    %739 = vmatprep.subr.bf16.mxu0 0
    %740 = vmatpush1.bf16.xpose.msra.mxu0 0
    %741 = vmatprep.subr.bf16.mxu0 0
    %742 = vmatpush1.bf16.xpose.msra.mxu0 0
    %743 = vmatprep.subr.bf16.mxu0 0
    %744 = vmatpush1.bf16.xpose.msra.mxu0 0
    %745 = vmatprep.subr.bf16.mxu0 0
    %746 = vmatpush1.bf16.xpose.msra.mxu0 0
    %747 = vmatprep.subr.bf16.mxu0 0
    %748 = vmatpush1.bf16.xpose.msra.mxu0 %v731
    %749 = vmatprep.subr.bf16.mxu0 0
    %750 = vmatpush2.bf16.xpose.msra.mxu0 0
    %751 = vmatprep.subr.bf16.mxu0 0
    %752 = vmatpush2.bf16.xpose.msra.mxu0 0
    %753 = vmatprep.subr.bf16.mxu0 0
    %754 = vmatpush2.bf16.xpose.msra.mxu0 0
    %755 = vmatprep.subr.bf16.mxu0 0
    %756 = vmatpush2.bf16.xpose.msra.mxu0 0
    %757 = vmatprep.subr.bf16.mxu0 0
    %758 = vmatpush2.bf16.xpose.msra.mxu0 0
    %759 = vmatprep.subr.bf16.mxu0 0
    %760 = vmatpush2.bf16.xpose.msra.mxu0 0
    %761 = vmatprep.subr.bf16.mxu0 0
    %762 = vmatpush2.bf16.xpose.msra.mxu0 0
    %763 = vmatprep.subr.bf16.mxu0 0
    %764 = vmatpush2.bf16.xpose.msra.mxu0 0
    %765 = vmatprep.mubr.bf16.mxu0 0
    %766 = vmatmul.mubr.bf16.gmra.mxu0 %v728
    %v767 = vpop.f32.mrf.mxu0
    %v768 = vadd.f32 0.0, %v767
    %v769 = vpop.f32.mrf.mxu0
    %v770 = vpop.f32.mrf.mxu0
    %v771 = vpop.f32.mrf.mxu0
    %772 = vdwg.mxu0
    %v774 = vsel %vm496, %v366, 0
    %v777 = vsel %vm496, %v426, 0
    %779 = vmatprep.subr.bf16.mxu0 0
    %780 = vmatpush1.bf16.xpose.msra.mxu0 0
    %781 = vmatprep.subr.bf16.mxu0 0
    %782 = vmatpush1.bf16.xpose.msra.mxu0 0
    %783 = vmatprep.subr.bf16.mxu0 0
    %784 = vmatpush1.bf16.xpose.msra.mxu0 0
    %785 = vmatprep.subr.bf16.mxu0 0
    %786 = vmatpush1.bf16.xpose.msra.mxu0 0
    %787 = vmatprep.subr.bf16.mxu0 0
    %788 = vmatpush1.bf16.xpose.msra.mxu0 0
    %789 = vmatprep.subr.bf16.mxu0 0
    %790 = vmatpush1.bf16.xpose.msra.mxu0 0
    %791 = vmatprep.subr.bf16.mxu0 0
    %792 = vmatpush1.bf16.xpose.msra.mxu0 0
    %793 = vmatprep.subr.bf16.mxu0 0
    %794 = vmatpush1.bf16.xpose.msra.mxu0 %v777
    %795 = vmatprep.subr.bf16.mxu0 0
    %796 = vmatpush2.bf16.xpose.msra.mxu0 0
    %797 = vmatprep.subr.bf16.mxu0 0
    %798 = vmatpush2.bf16.xpose.msra.mxu0 0
    %799 = vmatprep.subr.bf16.mxu0 0
    %800 = vmatpush2.bf16.xpose.msra.mxu0 0
    %801 = vmatprep.subr.bf16.mxu0 0
    %802 = vmatpush2.bf16.xpose.msra.mxu0 0
    %803 = vmatprep.subr.bf16.mxu0 0
    %804 = vmatpush2.bf16.xpose.msra.mxu0 0
    %805 = vmatprep.subr.bf16.mxu0 0
    %806 = vmatpush2.bf16.xpose.msra.mxu0 0
    %807 = vmatprep.subr.bf16.mxu0 0
    %808 = vmatpush2.bf16.xpose.msra.mxu0 0
    %809 = vmatprep.subr.bf16.mxu0 0
    %810 = vmatpush2.bf16.xpose.msra.mxu0 0
    %811 = vmatprep.mubr.bf16.mxu0 0
    %812 = vmatmul.mubr.bf16.gmra.mxu0 %v774
    %v813 = vpop.f32.mrf.mxu0
    %v814 = vadd.f32 0.0, %v813
    %v815 = vpop.f32.mrf.mxu0
    %v816 = vpop.f32.mrf.mxu0
    %v817 = vpop.f32.mrf.mxu0
    %818 = vdwg.mxu0
    %v820 = vsel %vm496, %v367, 0
    %v823 = vsel %vm496, %v427, 0
    %825 = vmatprep.subr.bf16.mxu0 0
    %826 = vmatpush1.bf16.xpose.msra.mxu0 0
    %827 = vmatprep.subr.bf16.mxu0 0
    %828 = vmatpush1.bf16.xpose.msra.mxu0 0
    %829 = vmatprep.subr.bf16.mxu0 0
    %830 = vmatpush1.bf16.xpose.msra.mxu0 0
    %831 = vmatprep.subr.bf16.mxu0 0
    %832 = vmatpush1.bf16.xpose.msra.mxu0 0
    %833 = vmatprep.subr.bf16.mxu0 0
    %834 = vmatpush1.bf16.xpose.msra.mxu0 0
    %835 = vmatprep.subr.bf16.mxu0 0
    %836 = vmatpush1.bf16.xpose.msra.mxu0 0
    %837 = vmatprep.subr.bf16.mxu0 0
    %838 = vmatpush1.bf16.xpose.msra.mxu0 0
    %839 = vmatprep.subr.bf16.mxu0 0
    %840 = vmatpush1.bf16.xpose.msra.mxu0 %v823
    %841 = vmatprep.subr.bf16.mxu0 0
    %842 = vmatpush2.bf16.xpose.msra.mxu0 0
    %843 = vmatprep.subr.bf16.mxu0 0
    %844 = vmatpush2.bf16.xpose.msra.mxu0 0
    %845 = vmatprep.subr.bf16.mxu0 0
    %846 = vmatpush2.bf16.xpose.msra.mxu0 0
    %847 = vmatprep.subr.bf16.mxu0 0
    %848 = vmatpush2.bf16.xpose.msra.mxu0 0
    %849 = vmatprep.subr.bf16.mxu0 0
    %850 = vmatpush2.bf16.xpose.msra.mxu0 0
    %851 = vmatprep.subr.bf16.mxu0 0
    %852 = vmatpush2.bf16.xpose.msra.mxu0 0
    %853 = vmatprep.subr.bf16.mxu0 0
    %854 = vmatpush2.bf16.xpose.msra.mxu0 0
    %855 = vmatprep.subr.bf16.mxu0 0
    %856 = vmatpush2.bf16.xpose.msra.mxu0 0
    %857 = vmatprep.mubr.bf16.mxu0 0
    %858 = vmatmul.mubr.bf16.gmra.mxu0 %v820
    %v859 = vpop.f32.mrf.mxu0
    %v860 = vadd.f32 0.0, %v859
    %v861 = vpop.f32.mrf.mxu0
    %v862 = vpop.f32.mrf.mxu0
    %v863 = vpop.f32.mrf.mxu0
    %864 = vdwg.mxu0
    %v866 = vsel %vm496, %v368, 0
    %v869 = vsel %vm496, %v428, 0
    %871 = vmatprep.subr.bf16.mxu0 0
    %872 = vmatpush1.bf16.xpose.msra.mxu0 0
    %873 = vmatprep.subr.bf16.mxu0 0
    %874 = vmatpush1.bf16.xpose.msra.mxu0 0
    %875 = vmatprep.subr.bf16.mxu0 0
    %876 = vmatpush1.bf16.xpose.msra.mxu0 0
    %877 = vmatprep.subr.bf16.mxu0 0
    %878 = vmatpush1.bf16.xpose.msra.mxu0 0
    %879 = vmatprep.subr.bf16.mxu0 0
    %880 = vmatpush1.bf16.xpose.msra.mxu0 0
    %881 = vmatprep.subr.bf16.mxu0 0
    %882 = vmatpush1.bf16.xpose.msra.mxu0 0
    %883 = vmatprep.subr.bf16.mxu0 0
    %884 = vmatpush1.bf16.xpose.msra.mxu0 0
    %885 = vmatprep.subr.bf16.mxu0 0
    %886 = vmatpush1.bf16.xpose.msra.mxu0 %v869
    %887 = vmatprep.subr.bf16.mxu0 0
    %888 = vmatpush2.bf16.xpose.msra.mxu0 0
    %889 = vmatprep.subr.bf16.mxu0 0
    %890 = vmatpush2.bf16.xpose.msra.mxu0 0
    %891 = vmatprep.subr.bf16.mxu0 0
    %892 = vmatpush2.bf16.xpose.msra.mxu0 0
    %893 = vmatprep.subr.bf16.mxu0 0
    %894 = vmatpush2.bf16.xpose.msra.mxu0 0
    %895 = vmatprep.subr.bf16.mxu0 0
    %896 = vmatpush2.bf16.xpose.msra.mxu0 0
    %897 = vmatprep.subr.bf16.mxu0 0
    %898 = vmatpush2.bf16.xpose.msra.mxu0 0
    %899 = vmatprep.subr.bf16.mxu0 0
    %900 = vmatpush2.bf16.xpose.msra.mxu0 0
    %901 = vmatprep.subr.bf16.mxu0 0
    %902 = vmatpush2.bf16.xpose.msra.mxu0 0
    %903 = vmatprep.mubr.bf16.mxu0 0
    %904 = vmatmul.mubr.bf16.gmra.mxu0 %v866
    %v905 = vpop.f32.mrf.mxu0
    %v906 = vadd.f32 0.0, %v905
    %v907 = vpop.f32.mrf.mxu0
    %v908 = vpop.f32.mrf.mxu0
    %v909 = vpop.f32.mrf.mxu0
    %910 = vdwg.mxu0
    %v912 = vsel %vm496, %v369, 0
    %v915 = vsel %vm496, %v429, 0
    %917 = vmatprep.subr.bf16.mxu0 0
    %918 = vmatpush1.bf16.xpose.msra.mxu0 0
    %919 = vmatprep.subr.bf16.mxu0 0
    %920 = vmatpush1.bf16.xpose.msra.mxu0 0
    %921 = vmatprep.subr.bf16.mxu0 0
    %922 = vmatpush1.bf16.xpose.msra.mxu0 0
    %923 = vmatprep.subr.bf16.mxu0 0
    %924 = vmatpush1.bf16.xpose.msra.mxu0 0
    %925 = vmatprep.subr.bf16.mxu0 0
    %926 = vmatpush1.bf16.xpose.msra.mxu0 0
    %927 = vmatprep.subr.bf16.mxu0 0
    %928 = vmatpush1.bf16.xpose.msra.mxu0 0
    %929 = vmatprep.subr.bf16.mxu0 0
    %930 = vmatpush1.bf16.xpose.msra.mxu0 0
    %931 = vmatprep.subr.bf16.mxu0 0
    %932 = vmatpush1.bf16.xpose.msra.mxu0 %v915
    %933 = vmatprep.subr.bf16.mxu0 0
    %934 = vmatpush2.bf16.xpose.msra.mxu0 0
    %935 = vmatprep.subr.bf16.mxu0 0
    %936 = vmatpush2.bf16.xpose.msra.mxu0 0
    %937 = vmatprep.subr.bf16.mxu0 0
    %938 = vmatpush2.bf16.xpose.msra.mxu0 0
    %939 = vmatprep.subr.bf16.mxu0 0
    %940 = vmatpush2.bf16.xpose.msra.mxu0 0
    %941 = vmatprep.subr.bf16.mxu0 0
    %942 = vmatpush2.bf16.xpose.msra.mxu0 0
    %943 = vmatprep.subr.bf16.mxu0 0
    %944 = vmatpush2.bf16.xpose.msra.mxu0 0
    %945 = vmatprep.subr.bf16.mxu0 0
    %946 = vmatpush2.bf16.xpose.msra.mxu0 0
    %947 = vmatprep.subr.bf16.mxu0 0
    %948 = vmatpush2.bf16.xpose.msra.mxu0 0
    %949 = vmatprep.mubr.bf16.mxu0 0
    %950 = vmatmul.mubr.bf16.gmra.mxu0 %v912
    %v951 = vpop.f32.mrf.mxu0
    %v952 = vadd.f32 0.0, %v951
    %v953 = vpop.f32.mrf.mxu0
    %v954 = vpop.f32.mrf.mxu0
    %v955 = vpop.f32.mrf.mxu0
    %956 = vdwg.mxu0
    %v958 = vsel %vm496, %v370, 0
    %v961 = vsel %vm496, %v430, 0
    %963 = vmatprep.subr.bf16.mxu0 0
    %964 = vmatpush1.bf16.xpose.msra.mxu0 0
    %965 = vmatprep.subr.bf16.mxu0 0
    %966 = vmatpush1.bf16.xpose.msra.mxu0 0
    %967 = vmatprep.subr.bf16.mxu0 0
    %968 = vmatpush1.bf16.xpose.msra.mxu0 0
    %969 = vmatprep.subr.bf16.mxu0 0
    %970 = vmatpush1.bf16.xpose.msra.mxu0 0
    %971 = vmatprep.subr.bf16.mxu0 0
    %972 = vmatpush1.bf16.xpose.msra.mxu0 0
    %973 = vmatprep.subr.bf16.mxu0 0
    %974 = vmatpush1.bf16.xpose.msra.mxu0 0
    %975 = vmatprep.subr.bf16.mxu0 0
    %976 = vmatpush1.bf16.xpose.msra.mxu0 0
    %977 = vmatprep.subr.bf16.mxu0 0
    %978 = vmatpush1.bf16.xpose.msra.mxu0 %v961
    %979 = vmatprep.subr.bf16.mxu0 0
    %980 = vmatpush2.bf16.xpose.msra.mxu0 0
    %981 = vmatprep.subr.bf16.mxu0 0
    %982 = vmatpush2.bf16.xpose.msra.mxu0 0
    %983 = vmatprep.subr.bf16.mxu0 0
    %984 = vmatpush2.bf16.xpose.msra.mxu0 0
    %985 = vmatprep.subr.bf16.mxu0 0
    %986 = vmatpush2.bf16.xpose.msra.mxu0 0
    %987 = vmatprep.subr.bf16.mxu0 0
    %988 = vmatpush2.bf16.xpose.msra.mxu0 0
    %989 = vmatprep.subr.bf16.mxu0 0
    %990 = vmatpush2.bf16.xpose.msra.mxu0 0
    %991 = vmatprep.subr.bf16.mxu0 0
    %992 = vmatpush2.bf16.xpose.msra.mxu0 0
    %993 = vmatprep.subr.bf16.mxu0 0
    %994 = vmatpush2.bf16.xpose.msra.mxu0 0
    %995 = vmatprep.mubr.bf16.mxu0 0
    %996 = vmatmul.mubr.bf16.gmra.mxu0 %v958
    %v997 = vpop.f32.mrf.mxu0
    %v998 = vadd.f32 0.0, %v997
    %v999 = vpop.f32.mrf.mxu0
    %v1000 = vpop.f32.mrf.mxu0
    %v1001 = vpop.f32.mrf.mxu0
    %1002 = vdwg.mxu0
    %v1004 = vsel %vm496, %v371, 0
    %v1007 = vsel %vm496, %v431, 0
    %1009 = vmatprep.subr.bf16.mxu0 0
    %1010 = vmatpush1.bf16.xpose.msra.mxu0 0
    %1011 = vmatprep.subr.bf16.mxu0 0
    %1012 = vmatpush1.bf16.xpose.msra.mxu0 0
    %1013 = vmatprep.subr.bf16.mxu0 0
    %1014 = vmatpush1.bf16.xpose.msra.mxu0 0
    %1015 = vmatprep.subr.bf16.mxu0 0
    %1016 = vmatpush1.bf16.xpose.msra.mxu0 0
    %1017 = vmatprep.subr.bf16.mxu0 0
    %1018 = vmatpush1.bf16.xpose.msra.mxu0 0
    %1019 = vmatprep.subr.bf16.mxu0 0
    %1020 = vmatpush1.bf16.xpose.msra.mxu0 0
    %1021 = vmatprep.subr.bf16.mxu0 0
    %1022 = vmatpush1.bf16.xpose.msra.mxu0 0
    %1023 = vmatprep.subr.bf16.mxu0 0
    %1024 = vmatpush1.bf16.xpose.msra.mxu0 %v1007
    %1025 = vmatprep.subr.bf16.mxu0 0
    %1026 = vmatpush2.bf16.xpose.msra.mxu0 0
    %1027 = vmatprep.subr.bf16.mxu0 0
    %1028 = vmatpush2.bf16.xpose.msra.mxu0 0
    %1029 = vmatprep.subr.bf16.mxu0 0
    %1030 = vmatpush2.bf16.xpose.msra.mxu0 0
    %1031 = vmatprep.subr.bf16.mxu0 0
    %1032 = vmatpush2.bf16.xpose.msra.mxu0 0
    %1033 = vmatprep.subr.bf16.mxu0 0
    %1034 = vmatpush2.bf16.xpose.msra.mxu0 0
    %1035 = vmatprep.subr.bf16.mxu0 0
    %1036 = vmatpush2.bf16.xpose.msra.mxu0 0
    %1037 = vmatprep.subr.bf16.mxu0 0
    %1038 = vmatpush2.bf16.xpose.msra.mxu0 0
    %1039 = vmatprep.subr.bf16.mxu0 0
    %1040 = vmatpush2.bf16.xpose.msra.mxu0 0
    %1041 = vmatprep.mubr.bf16.mxu0 0
    %1042 = vmatmul.mubr.bf16.gmra.mxu0 %v1004
    %v1043 = vpop.f32.mrf.mxu0
    %v1044 = vadd.f32 0.0, %v1043
    %v1045 = vpop.f32.mrf.mxu0
    %v1046 = vpop.f32.mrf.mxu0
    %v1047 = vpop.f32.mrf.mxu0
    %1048 = vdwg.mxu0
    %v1050 = vsel %vm496, %v372, 0
    %v1053 = vsel %vm496, %v432, 0
    %1055 = vmatprep.subr.bf16.mxu0 0
    %1056 = vmatpush1.bf16.xpose.msra.mxu0 0
    %1057 = vmatprep.subr.bf16.mxu0 0
    %1058 = vmatpush1.bf16.xpose.msra.mxu0 0
    %1059 = vmatprep.subr.bf16.mxu0 0
    %1060 = vmatpush1.bf16.xpose.msra.mxu0 0
    %1061 = vmatprep.subr.bf16.mxu0 0
    %1062 = vmatpush1.bf16.xpose.msra.mxu0 0
    %1063 = vmatprep.subr.bf16.mxu0 0
    %1064 = vmatpush1.bf16.xpose.msra.mxu0 0
    %1065 = vmatprep.subr.bf16.mxu0 0
    %1066 = vmatpush1.bf16.xpose.msra.mxu0 0
    %1067 = vmatprep.subr.bf16.mxu0 0
    %1068 = vmatpush1.bf16.xpose.msra.mxu0 0
    %1069 = vmatprep.subr.bf16.mxu0 0
    %1070 = vmatpush1.bf16.xpose.msra.mxu0 %v1053
    %1071 = vmatprep.subr.bf16.mxu0 0
    %1072 = vmatpush2.bf16.xpose.msra.mxu0 0
    %1073 = vmatprep.subr.bf16.mxu0 0
    %1074 = vmatpush2.bf16.xpose.msra.mxu0 0
    %1075 = vmatprep.subr.bf16.mxu0 0
    %1076 = vmatpush2.bf16.xpose.msra.mxu0 0
    %1077 = vmatprep.subr.bf16.mxu0 0
    %1078 = vmatpush2.bf16.xpose.msra.mxu0 0
    %1079 = vmatprep.subr.bf16.mxu0 0
    %1080 = vmatpush2.bf16.xpose.msra.mxu0 0
    %1081 = vmatprep.subr.bf16.mxu0 0
    %1082 = vmatpush2.bf16.xpose.msra.mxu0 0
    %1083 = vmatprep.subr.bf16.mxu0 0
    %1084 = vmatpush2.bf16.xpose.msra.mxu0 0
    %1085 = vmatprep.subr.bf16.mxu0 0
    %1086 = vmatpush2.bf16.xpose.msra.mxu0 0
    %1087 = vmatprep.mubr.bf16.mxu0 0
    %1088 = vmatmul.mubr.bf16.gmra.mxu0 %v1050
    %v1089 = vpop.f32.mrf.mxu0
    %v1090 = vadd.f32 0.0, %v1089
    %v1091 = vpop.f32.mrf.mxu0
    %v1092 = vpop.f32.mrf.mxu0
    %v1093 = vpop.f32.mrf.mxu0
    %1094 = vdwg.mxu0
    %v1096 = vsel %vm496, %v373, 0
    %v1099 = vsel %vm496, %v433, 0
    %1101 = vmatprep.subr.bf16.mxu0 0
    %1102 = vmatpush1.bf16.xpose.msra.mxu0 0
    %1103 = vmatprep.subr.bf16.mxu0 0
    %1104 = vmatpush1.bf16.xpose.msra.mxu0 0
    %1105 = vmatprep.subr.bf16.mxu0 0
    %1106 = vmatpush1.bf16.xpose.msra.mxu0 0
    %1107 = vmatprep.subr.bf16.mxu0 0
    %1108 = vmatpush1.bf16.xpose.msra.mxu0 0
    %1109 = vmatprep.subr.bf16.mxu0 0
    %1110 = vmatpush1.bf16.xpose.msra.mxu0 0
    %1111 = vmatprep.subr.bf16.mxu0 0
    %1112 = vmatpush1.bf16.xpose.msra.mxu0 0
    %1113 = vmatprep.subr.bf16.mxu0 0
    %1114 = vmatpush1.bf16.xpose.msra.mxu0 0
    %1115 = vmatprep.subr.bf16.mxu0 0
    %1116 = vmatpush1.bf16.xpose.msra.mxu0 %v1099
    %1117 = vmatprep.subr.bf16.mxu0 0
    %1118 = vmatpush2.bf16.xpose.msra.mxu0 0
    %1119 = vmatprep.subr.bf16.mxu0 0
    %1120 = vmatpush2.bf16.xpose.msra.mxu0 0
    %1121 = vmatprep.subr.bf16.mxu0 0
    %1122 = vmatpush2.bf16.xpose.msra.mxu0 0
    %1123 = vmatprep.subr.bf16.mxu0 0
    %1124 = vmatpush2.bf16.xpose.msra.mxu0 0
    %1125 = vmatprep.subr.bf16.mxu0 0
    %1126 = vmatpush2.bf16.xpose.msra.mxu0 0
    %1127 = vmatprep.subr.bf16.mxu0 0
    %1128 = vmatpush2.bf16.xpose.msra.mxu0 0
    %1129 = vmatprep.subr.bf16.mxu0 0
    %1130 = vmatpush2.bf16.xpose.msra.mxu0 0
    %1131 = vmatprep.subr.bf16.mxu0 0
    %1132 = vmatpush2.bf16.xpose.msra.mxu0 0
    %1133 = vmatprep.mubr.bf16.mxu0 0
    %1134 = vmatmul.mubr.bf16.gmra.mxu0 %v1096
    %v1135 = vpop.f32.mrf.mxu0
    %v1136 = vadd.f32 0.0, %v1135
    %v1137 = vpop.f32.mrf.mxu0
    %v1138 = vpop.f32.mrf.mxu0
    %v1139 = vpop.f32.mrf.mxu0
    %1140 = vdwg.mxu0
    %v1142 = vsel %vm496, %v374, 0
    %v1145 = vsel %vm496, %v434, 0
    %1147 = vmatprep.subr.bf16.mxu0 0
    %1148 = vmatpush1.bf16.xpose.msra.mxu0 0
    %1149 = vmatprep.subr.bf16.mxu0 0
    %1150 = vmatpush1.bf16.xpose.msra.mxu0 0
    %1151 = vmatprep.subr.bf16.mxu0 0
    %1152 = vmatpush1.bf16.xpose.msra.mxu0 0
    %1153 = vmatprep.subr.bf16.mxu0 0
    %1154 = vmatpush1.bf16.xpose.msra.mxu0 0
    %1155 = vmatprep.subr.bf16.mxu0 0
    %1156 = vmatpush1.bf16.xpose.msra.mxu0 0
    %1157 = vmatprep.subr.bf16.mxu0 0
    %1158 = vmatpush1.bf16.xpose.msra.mxu0 0
    %1159 = vmatprep.subr.bf16.mxu0 0
    %1160 = vmatpush1.bf16.xpose.msra.mxu0 0
    %1161 = vmatprep.subr.bf16.mxu0 0
    %1162 = vmatpush1.bf16.xpose.msra.mxu0 %v1145
    %1163 = vmatprep.subr.bf16.mxu0 0
    %1164 = vmatpush2.bf16.xpose.msra.mxu0 0
    %1165 = vmatprep.subr.bf16.mxu0 0
    %1166 = vmatpush2.bf16.xpose.msra.mxu0 0
    %1167 = vmatprep.subr.bf16.mxu0 0
    %1168 = vmatpush2.bf16.xpose.msra.mxu0 0
    %1169 = vmatprep.subr.bf16.mxu0 0
    %1170 = vmatpush2.bf16.xpose.msra.mxu0 0
    %1171 = vmatprep.subr.bf16.mxu0 0
    %1172 = vmatpush2.bf16.xpose.msra.mxu0 0
    %1173 = vmatprep.subr.bf16.mxu0 0
    %1174 = vmatpush2.bf16.xpose.msra.mxu0 0
    %1175 = vmatprep.subr.bf16.mxu0 0
    %1176 = vmatpush2.bf16.xpose.msra.mxu0 0
    %1177 = vmatprep.subr.bf16.mxu0 0
    %1178 = vmatpush2.bf16.xpose.msra.mxu0 0
    %1179 = vmatprep.mubr.bf16.mxu0 0
    %1180 = vmatmul.mubr.bf16.gmra.mxu0 %v1142
    %v1181 = vpop.f32.mrf.mxu0
    %v1182 = vadd.f32 0.0, %v1181
    %v1183 = vpop.f32.mrf.mxu0
    %v1184 = vpop.f32.mrf.mxu0
    %v1185 = vpop.f32.mrf.mxu0
    %1186 = vdwg.mxu0
    %v1188 = vsel %vm496, %v375, 0
    %v1191 = vsel %vm496, %v435, 0
    %1193 = vmatprep.subr.bf16.mxu0 0
    %1194 = vmatpush1.bf16.xpose.msra.mxu0 0
    %1195 = vmatprep.subr.bf16.mxu0 0
    %1196 = vmatpush1.bf16.xpose.msra.mxu0 0
    %1197 = vmatprep.subr.bf16.mxu0 0
    %1198 = vmatpush1.bf16.xpose.msra.mxu0 0
    %1199 = vmatprep.subr.bf16.mxu0 0
    %1200 = vmatpush1.bf16.xpose.msra.mxu0 0
    %1201 = vmatprep.subr.bf16.mxu0 0
    %1202 = vmatpush1.bf16.xpose.msra.mxu0 0
    %1203 = vmatprep.subr.bf16.mxu0 0
    %1204 = vmatpush1.bf16.xpose.msra.mxu0 0
    %1205 = vmatprep.subr.bf16.mxu0 0
    %1206 = vmatpush1.bf16.xpose.msra.mxu0 0
    %1207 = vmatprep.subr.bf16.mxu0 0
    %1208 = vmatpush1.bf16.xpose.msra.mxu0 %v1191
    %1209 = vmatprep.subr.bf16.mxu0 0
    %1210 = vmatpush2.bf16.xpose.msra.mxu0 0
    %1211 = vmatprep.subr.bf16.mxu0 0
    %1212 = vmatpush2.bf16.xpose.msra.mxu0 0
    %1213 = vmatprep.subr.bf16.mxu0 0
    %1214 = vmatpush2.bf16.xpose.msra.mxu0 0
    %1215 = vmatprep.subr.bf16.mxu0 0
    %1216 = vmatpush2.bf16.xpose.msra.mxu0 0
    %1217 = vmatprep.subr.bf16.mxu0 0
    %1218 = vmatpush2.bf16.xpose.msra.mxu0 0
    %1219 = vmatprep.subr.bf16.mxu0 0
    %1220 = vmatpush2.bf16.xpose.msra.mxu0 0
    %1221 = vmatprep.subr.bf16.mxu0 0
    %1222 = vmatpush2.bf16.xpose.msra.mxu0 0
    %1223 = vmatprep.subr.bf16.mxu0 0
    %1224 = vmatpush2.bf16.xpose.msra.mxu0 0
    %1225 = vmatprep.mubr.bf16.mxu0 0
    %1226 = vmatmul.mubr.bf16.gmra.mxu0 %v1188
    %v1227 = vpop.f32.mrf.mxu0
    %v1228 = vadd.f32 0.0, %v1227
    %v1229 = vpop.f32.mrf.mxu0
    %v1230 = vpop.f32.mrf.mxu0
    %v1231 = vpop.f32.mrf.mxu0
    %1232 = vdwg.mxu0
    %vm1233 = vcmask 64512
    %v1234 = vsel %vm1233, %v538, -inf
    %1235 = vmax.xlane.f32.xlu0 %v1234
    %v1236 = vpop.xlane.xlu0 %1235
    %v1237 = vsel %vm1233, %v584, -inf
    %1238 = vmax.xlane.f32.xlu0 %v1237
    %v1239 = vpop.xlane.xlu0 %1238
    %v1240 = vsel %vm1233, %v630, -inf
    %1241 = vmax.xlane.f32.xlu0 %v1240
    %v1242 = vpop.xlane.xlu0 %1241
    %v1243 = vsel %vm1233, %v676, -inf
    %1244 = vmax.xlane.f32.xlu0 %v1243
    %v1245 = vpop.xlane.xlu0 %1244
    %v1246 = vsel %vm1233, %v722, -inf
    %1247 = vmax.xlane.f32.xlu0 %v1246
    %v1248 = vpop.xlane.xlu0 %1247
    %v1249 = vsel %vm1233, %v768, -inf
    %1250 = vmax.xlane.f32.xlu0 %v1249
    %v1251 = vpop.xlane.xlu0 %1250
    %v1252 = vsel %vm1233, %v814, -inf
    %1253 = vmax.xlane.f32.xlu0 %v1252
    %v1254 = vpop.xlane.xlu0 %1253
    %v1255 = vsel %vm1233, %v860, -inf
    %1256 = vmax.xlane.f32.xlu0 %v1255
    %v1257 = vpop.xlane.xlu0 %1256
    %v1258 = vsel %vm1233, %v906, -inf
    %1259 = vmax.xlane.f32.xlu0 %v1258
    %v1260 = vpop.xlane.xlu0 %1259
    %v1261 = vsel %vm1233, %v952, -inf
    %1262 = vmax.xlane.f32.xlu0 %v1261
    %v1263 = vpop.xlane.xlu0 %1262
    %v1264 = vsel %vm1233, %v998, -inf
    %1265 = vmax.xlane.f32.xlu0 %v1264
    %v1266 = vpop.xlane.xlu0 %1265
    %v1267 = vsel %vm1233, %v1044, -inf
    %1268 = vmax.xlane.f32.xlu0 %v1267
    %v1269 = vpop.xlane.xlu0 %1268
    %v1270 = vsel %vm1233, %v1090, -inf
    %1271 = vmax.xlane.f32.xlu0 %v1270
    %v1272 = vpop.xlane.xlu0 %1271
    %v1273 = vsel %vm1233, %v1136, -inf
    %1274 = vmax.xlane.f32.xlu0 %v1273
    %v1275 = vpop.xlane.xlu0 %1274
    %v1276 = vsel %vm1233, %v1182, -inf
    %1277 = vmax.xlane.f32.xlu0 %v1276
    %v1278 = vpop.xlane.xlu0 %1277
    %v1279 = vsel %vm1233, %v1228, -inf
    %1280 = vmax.xlane.f32.xlu0 %v1279
    %v1281 = vpop.xlane.xlu0 %1280
    %v1282 = vsub.f32 %v538, %v1236
    %v1283 = vsub.f32 %v584, %v1239
    %v1284 = vsub.f32 %v630, %v1242
    %v1285 = vsub.f32 %v676, %v1245
    %v1286 = vsub.f32 %v722, %v1248
    %v1287 = vsub.f32 %v768, %v1251
    %v1288 = vsub.f32 %v814, %v1254
    %v1289 = vsub.f32 %v860, %v1257
    %v1290 = vsub.f32 %v906, %v1260
    %v1291 = vsub.f32 %v952, %v1263
    %v1292 = vsub.f32 %v998, %v1266
    %v1293 = vsub.f32 %v1044, %v1269
    %v1294 = vsub.f32 %v1090, %v1272
    %v1295 = vsub.f32 %v1136, %v1275
    %v1296 = vsub.f32 %v1182, %v1278
    %v1297 = vsub.f32 %v1228, %v1281
    %v1298 = vmul.f32 %v1282, 1.442695
    %v1299 = vpow.pop %v1298
    %v1300 = vmul.f32 %v1283, 1.442695
    %v1301 = vpow.pop %v1300
    %v1302 = vmul.f32 %v1284, 1.442695
    %v1303 = vpow.pop %v1302
    %v1304 = vmul.f32 %v1285, 1.442695
    %v1305 = vpow.pop %v1304
    %v1306 = vmul.f32 %v1286, 1.442695
    %v1307 = vpow.pop %v1306
    %v1308 = vmul.f32 %v1287, 1.442695
    %v1309 = vpow.pop %v1308
    %v1310 = vmul.f32 %v1288, 1.442695
    %v1311 = vpow.pop %v1310
    %v1312 = vmul.f32 %v1289, 1.442695
    %v1313 = vpow.pop %v1312
    %v1314 = vmul.f32 %v1290, 1.442695
    %v1315 = vpow.pop %v1314
    %v1316 = vmul.f32 %v1291, 1.442695
    %v1317 = vpow.pop %v1316
    %v1318 = vmul.f32 %v1292, 1.442695
    %v1319 = vpow.pop %v1318
    %v1320 = vmul.f32 %v1293, 1.442695
    %v1321 = vpow.pop %v1320
    %v1322 = vmul.f32 %v1294, 1.442695
    %v1323 = vpow.pop %v1322
    %v1324 = vmul.f32 %v1295, 1.442695
    %v1325 = vpow.pop %v1324
    %v1326 = vmul.f32 %v1296, 1.442695
    %v1327 = vpow.pop %v1326
    %v1328 = vmul.f32 %v1297, 1.442695
    %v1329 = vpow.pop %v1328
    %v1330 = vsel %vm1233, %v1299, 0.0
    %1331 = vadd.xlane.f32.xlu0 %v1330
    %v1332 = vpop.xlane.xlu0 %1331
    %v1333 = vsel %vm1233, %v1301, 0.0
    %1334 = vadd.xlane.f32.xlu0 %v1333
    %v1335 = vpop.xlane.xlu0 %1334
    %v1336 = vsel %vm1233, %v1303, 0.0
    %1337 = vadd.xlane.f32.xlu0 %v1336
    %v1338 = vpop.xlane.xlu0 %1337
    %v1339 = vsel %vm1233, %v1305, 0.0
    %1340 = vadd.xlane.f32.xlu0 %v1339
    %v1341 = vpop.xlane.xlu0 %1340
    %v1342 = vsel %vm1233, %v1307, 0.0
    %1343 = vadd.xlane.f32.xlu0 %v1342
    %v1344 = vpop.xlane.xlu0 %1343
    %v1345 = vsel %vm1233, %v1309, 0.0
    %1346 = vadd.xlane.f32.xlu0 %v1345
    %v1347 = vpop.xlane.xlu0 %1346
    %v1348 = vsel %vm1233, %v1311, 0.0
    %1349 = vadd.xlane.f32.xlu0 %v1348
    %v1350 = vpop.xlane.xlu0 %1349
    %v1351 = vsel %vm1233, %v1313, 0.0
    %1352 = vadd.xlane.f32.xlu0 %v1351
    %v1353 = vpop.xlane.xlu0 %1352
    %v1354 = vsel %vm1233, %v1315, 0.0
    %1355 = vadd.xlane.f32.xlu0 %v1354
    %v1356 = vpop.xlane.xlu0 %1355
    %v1357 = vsel %vm1233, %v1317, 0.0
    %1358 = vadd.xlane.f32.xlu0 %v1357
    %v1359 = vpop.xlane.xlu0 %1358
    %v1360 = vsel %vm1233, %v1319, 0.0
    %1361 = vadd.xlane.f32.xlu0 %v1360
    %v1362 = vpop.xlane.xlu0 %1361
    %v1363 = vsel %vm1233, %v1321, 0.0
    %1364 = vadd.xlane.f32.xlu0 %v1363
    %v1365 = vpop.xlane.xlu0 %1364
    %v1366 = vsel %vm1233, %v1323, 0.0
    %1367 = vadd.xlane.f32.xlu0 %v1366
    %v1368 = vpop.xlane.xlu0 %1367
    %v1369 = vsel %vm1233, %v1325, 0.0
    %1370 = vadd.xlane.f32.xlu0 %v1369
    %v1371 = vpop.xlane.xlu0 %1370
    %v1372 = vsel %vm1233, %v1327, 0.0
    %1373 = vadd.xlane.f32.xlu0 %v1372
    %v1374 = vpop.xlane.xlu0 %1373
    %v1375 = vsel %vm1233, %v1329, 0.0
    %1376 = vadd.xlane.f32.xlu0 %v1375
    %v1377 = vpop.xlane.xlu0 %1376
    %v1378 = vrcp.pop %v1332
    %v1379 = vrcp.pop %v1335
    %v1380 = vrcp.pop %v1338
    %v1381 = vrcp.pop %v1341
    %v1382 = vrcp.pop %v1344
    %v1383 = vrcp.pop %v1347
    %v1384 = vrcp.pop %v1350
    %v1385 = vrcp.pop %v1353
    %v1386 = vrcp.pop %v1356
    %v1387 = vrcp.pop %v1359
    %v1388 = vrcp.pop %v1362
    %v1389 = vrcp.pop %v1365
    %v1390 = vrcp.pop %v1368
    %v1391 = vrcp.pop %v1371
    %v1392 = vrcp.pop %v1374
    %v1393 = vrcp.pop %v1377
    %v1394 = vmul.f32 %v1299, %v1378
    %v1395 = vmul.f32 %v1301, %v1379
    %v1396 = vmul.f32 %v1303, %v1380
    %v1397 = vmul.f32 %v1305, %v1381
    %v1398 = vmul.f32 %v1307, %v1382
    %v1399 = vmul.f32 %v1309, %v1383
    %v1400 = vmul.f32 %v1311, %v1384
    %v1401 = vmul.f32 %v1313, %v1385
    %v1402 = vmul.f32 %v1315, %v1386
    %v1403 = vmul.f32 %v1317, %v1387
    %v1404 = vmul.f32 %v1319, %v1388
    %v1405 = vmul.f32 %v1321, %v1389
    %v1406 = vmul.f32 %v1323, %v1390
    %v1407 = vmul.f32 %v1325, %v1391
    %v1408 = vmul.f32 %v1327, %v1392
    %v1409 = vmul.f32 %v1329, %v1393
    %v1410 = vpack.c.bf16 %v1394, %v1394
    %v1411 = vpack.c.bf16 %v1395, %v1395
    %v1412 = vpack.c.bf16 %v1396, %v1396
    %v1413 = vpack.c.bf16 %v1397, %v1397
    %v1414 = vpack.c.bf16 %v1398, %v1398
    %v1415 = vpack.c.bf16 %v1399, %v1399
    %v1416 = vpack.c.bf16 %v1400, %v1400
    %v1417 = vpack.c.bf16 %v1401, %v1401
    %v1418 = vpack.c.bf16 %v1402, %v1402
    %v1419 = vpack.c.bf16 %v1403, %v1403
    %v1420 = vpack.c.bf16 %v1404, %v1404
    %v1421 = vpack.c.bf16 %v1405, %v1405
    %v1422 = vpack.c.bf16 %v1406, %v1406
    %v1423 = vpack.c.bf16 %v1407, %v1407
    %v1424 = vpack.c.bf16 %v1408, %v1408
    %v1425 = vpack.c.bf16 %v1409, %v1409
    %v1427 = vsel %vm1233, %v1410, 0
    %vm1429 = vcmask 1043456
    %v1431 = vsel %vm1429, %v480, 0
    %1433 = vmatprep.subr.bf16.mxu0 0
    %1434 = vmatpush1.bf16.msra.mxu0 0
    %1435 = vmatprep.subr.bf16.mxu0 0
    %1436 = vmatpush1.bf16.msra.mxu0 0
    %1437 = vmatprep.subr.bf16.mxu0 0
    %1438 = vmatpush1.bf16.msra.mxu0 0
    %1439 = vmatprep.subr.bf16.mxu0 0
    %1440 = vmatpush1.bf16.msra.mxu0 0
    %1441 = vmatprep.subr.bf16.mxu0 0
    %1442 = vmatpush1.bf16.msra.mxu0 0
    %1443 = vmatprep.subr.bf16.mxu0 0
    %1444 = vmatpush1.bf16.msra.mxu0 0
    %1445 = vmatprep.subr.bf16.mxu0 0
    %1446 = vmatpush1.bf16.msra.mxu0 0
    %1447 = vmatprep.subr.bf16.mxu0 0
    %1448 = vmatpush1.bf16.msra.mxu0 %v1431
    %1449 = vmatprep.subr.bf16.mxu0 0
    %1450 = vmatpush2.bf16.msra.mxu0 0
    %1451 = vmatprep.subr.bf16.mxu0 0
    %1452 = vmatpush2.bf16.msra.mxu0 0
    %1453 = vmatprep.subr.bf16.mxu0 0
    %1454 = vmatpush2.bf16.msra.mxu0 0
    %1455 = vmatprep.subr.bf16.mxu0 0
    %1456 = vmatpush2.bf16.msra.mxu0 0
    %1457 = vmatprep.subr.bf16.mxu0 0
    %1458 = vmatpush2.bf16.msra.mxu0 0
    %1459 = vmatprep.subr.bf16.mxu0 0
    %1460 = vmatpush2.bf16.msra.mxu0 0
    %1461 = vmatprep.subr.bf16.mxu0 0
    %1462 = vmatpush2.bf16.msra.mxu0 0
    %1463 = vmatprep.subr.bf16.mxu0 0
    %1464 = vmatpush2.bf16.msra.mxu0 0
    %1465 = vmatprep.mubr.bf16.mxu0 0
    %1466 = vmatmul.mubr.bf16.gmra.mxu0 %v1427
    %v1467 = vpop.f32.mrf.mxu0
    %v1468 = vadd.f32 0.0, %v1467
    %v1469 = vpop.f32.mrf.mxu0
    %v1470 = vpop.f32.mrf.mxu0
    %v1471 = vpop.f32.mrf.mxu0
    %1472 = vdwg.mxu0
    %v1474 = vsel %vm1233, %v1411, 0
    %v1477 = vsel %vm1429, %v481, 0
    %1479 = vmatprep.subr.bf16.mxu0 0
    %1480 = vmatpush1.bf16.msra.mxu0 0
    %1481 = vmatprep.subr.bf16.mxu0 0
    %1482 = vmatpush1.bf16.msra.mxu0 0
    %1483 = vmatprep.subr.bf16.mxu0 0
    %1484 = vmatpush1.bf16.msra.mxu0 0
    %1485 = vmatprep.subr.bf16.mxu0 0
    %1486 = vmatpush1.bf16.msra.mxu0 0
    %1487 = vmatprep.subr.bf16.mxu0 0
    %1488 = vmatpush1.bf16.msra.mxu0 0
    %1489 = vmatprep.subr.bf16.mxu0 0
    %1490 = vmatpush1.bf16.msra.mxu0 0
    %1491 = vmatprep.subr.bf16.mxu0 0
    %1492 = vmatpush1.bf16.msra.mxu0 0
    %1493 = vmatprep.subr.bf16.mxu0 0
    %1494 = vmatpush1.bf16.msra.mxu0 %v1477
    %1495 = vmatprep.subr.bf16.mxu0 0
    %1496 = vmatpush2.bf16.msra.mxu0 0
    %1497 = vmatprep.subr.bf16.mxu0 0
    %1498 = vmatpush2.bf16.msra.mxu0 0
    %1499 = vmatprep.subr.bf16.mxu0 0
    %1500 = vmatpush2.bf16.msra.mxu0 0
    %1501 = vmatprep.subr.bf16.mxu0 0
    %1502 = vmatpush2.bf16.msra.mxu0 0
    %1503 = vmatprep.subr.bf16.mxu0 0
    %1504 = vmatpush2.bf16.msra.mxu0 0
    %1505 = vmatprep.subr.bf16.mxu0 0
    %1506 = vmatpush2.bf16.msra.mxu0 0
    %1507 = vmatprep.subr.bf16.mxu0 0
    %1508 = vmatpush2.bf16.msra.mxu0 0
    %1509 = vmatprep.subr.bf16.mxu0 0
    %1510 = vmatpush2.bf16.msra.mxu0 0
    %1511 = vmatprep.mubr.bf16.mxu0 0
    %1512 = vmatmul.mubr.bf16.gmra.mxu0 %v1474
    %v1513 = vpop.f32.mrf.mxu0
    %v1514 = vadd.f32 0.0, %v1513
    %v1515 = vpop.f32.mrf.mxu0
    %v1516 = vpop.f32.mrf.mxu0
    %v1517 = vpop.f32.mrf.mxu0
    %1518 = vdwg.mxu0
    %v1520 = vsel %vm1233, %v1412, 0
    %v1523 = vsel %vm1429, %v482, 0
    %1525 = vmatprep.subr.bf16.mxu0 0
    %1526 = vmatpush1.bf16.msra.mxu0 0
    %1527 = vmatprep.subr.bf16.mxu0 0
    %1528 = vmatpush1.bf16.msra.mxu0 0
    %1529 = vmatprep.subr.bf16.mxu0 0
    %1530 = vmatpush1.bf16.msra.mxu0 0
    %1531 = vmatprep.subr.bf16.mxu0 0
    %1532 = vmatpush1.bf16.msra.mxu0 0
    %1533 = vmatprep.subr.bf16.mxu0 0
    %1534 = vmatpush1.bf16.msra.mxu0 0
    %1535 = vmatprep.subr.bf16.mxu0 0
    %1536 = vmatpush1.bf16.msra.mxu0 0
    %1537 = vmatprep.subr.bf16.mxu0 0
    %1538 = vmatpush1.bf16.msra.mxu0 0
    %1539 = vmatprep.subr.bf16.mxu0 0
    %1540 = vmatpush1.bf16.msra.mxu0 %v1523
    %1541 = vmatprep.subr.bf16.mxu0 0
    %1542 = vmatpush2.bf16.msra.mxu0 0
    %1543 = vmatprep.subr.bf16.mxu0 0
    %1544 = vmatpush2.bf16.msra.mxu0 0
    %1545 = vmatprep.subr.bf16.mxu0 0
    %1546 = vmatpush2.bf16.msra.mxu0 0
    %1547 = vmatprep.subr.bf16.mxu0 0
    %1548 = vmatpush2.bf16.msra.mxu0 0
    %1549 = vmatprep.subr.bf16.mxu0 0
    %1550 = vmatpush2.bf16.msra.mxu0 0
    %1551 = vmatprep.subr.bf16.mxu0 0
    %1552 = vmatpush2.bf16.msra.mxu0 0
    %1553 = vmatprep.subr.bf16.mxu0 0
    %1554 = vmatpush2.bf16.msra.mxu0 0
    %1555 = vmatprep.subr.bf16.mxu0 0
    %1556 = vmatpush2.bf16.msra.mxu0 0
    %1557 = vmatprep.mubr.bf16.mxu0 0
    %1558 = vmatmul.mubr.bf16.gmra.mxu0 %v1520
    %v1559 = vpop.f32.mrf.mxu0
    %v1560 = vadd.f32 0.0, %v1559
    %v1561 = vpop.f32.mrf.mxu0
    %v1562 = vpop.f32.mrf.mxu0
    %v1563 = vpop.f32.mrf.mxu0
    %1564 = vdwg.mxu0
    %v1566 = vsel %vm1233, %v1413, 0
    %v1569 = vsel %vm1429, %v483, 0
    %1571 = vmatprep.subr.bf16.mxu0 0
    %1572 = vmatpush1.bf16.msra.mxu0 0
    %1573 = vmatprep.subr.bf16.mxu0 0
    %1574 = vmatpush1.bf16.msra.mxu0 0
    %1575 = vmatprep.subr.bf16.mxu0 0
    %1576 = vmatpush1.bf16.msra.mxu0 0
    %1577 = vmatprep.subr.bf16.mxu0 0
    %1578 = vmatpush1.bf16.msra.mxu0 0
    %1579 = vmatprep.subr.bf16.mxu0 0
    %1580 = vmatpush1.bf16.msra.mxu0 0
    %1581 = vmatprep.subr.bf16.mxu0 0
    %1582 = vmatpush1.bf16.msra.mxu0 0
    %1583 = vmatprep.subr.bf16.mxu0 0
    %1584 = vmatpush1.bf16.msra.mxu0 0
    %1585 = vmatprep.subr.bf16.mxu0 0
    %1586 = vmatpush1.bf16.msra.mxu0 %v1569
    %1587 = vmatprep.subr.bf16.mxu0 0
    %1588 = vmatpush2.bf16.msra.mxu0 0
    %1589 = vmatprep.subr.bf16.mxu0 0
    %1590 = vmatpush2.bf16.msra.mxu0 0
    %1591 = vmatprep.subr.bf16.mxu0 0
    %1592 = vmatpush2.bf16.msra.mxu0 0
    %1593 = vmatprep.subr.bf16.mxu0 0
    %1594 = vmatpush2.bf16.msra.mxu0 0
    %1595 = vmatprep.subr.bf16.mxu0 0
    %1596 = vmatpush2.bf16.msra.mxu0 0
    %1597 = vmatprep.subr.bf16.mxu0 0
    %1598 = vmatpush2.bf16.msra.mxu0 0
    %1599 = vmatprep.subr.bf16.mxu0 0
    %1600 = vmatpush2.bf16.msra.mxu0 0
    %1601 = vmatprep.subr.bf16.mxu0 0
    %1602 = vmatpush2.bf16.msra.mxu0 0
    %1603 = vmatprep.mubr.bf16.mxu0 0
    %1604 = vmatmul.mubr.bf16.gmra.mxu0 %v1566
    %v1605 = vpop.f32.mrf.mxu0
    %v1606 = vadd.f32 0.0, %v1605
    %v1607 = vpop.f32.mrf.mxu0
    %v1608 = vpop.f32.mrf.mxu0
    %v1609 = vpop.f32.mrf.mxu0
    %1610 = vdwg.mxu0
    %v1612 = vsel %vm1233, %v1414, 0
    %v1615 = vsel %vm1429, %v484, 0
    %1617 = vmatprep.subr.bf16.mxu0 0
    %1618 = vmatpush1.bf16.msra.mxu0 0
    %1619 = vmatprep.subr.bf16.mxu0 0
    %1620 = vmatpush1.bf16.msra.mxu0 0
    %1621 = vmatprep.subr.bf16.mxu0 0
    %1622 = vmatpush1.bf16.msra.mxu0 0
    %1623 = vmatprep.subr.bf16.mxu0 0
    %1624 = vmatpush1.bf16.msra.mxu0 0
    %1625 = vmatprep.subr.bf16.mxu0 0
    %1626 = vmatpush1.bf16.msra.mxu0 0
    %1627 = vmatprep.subr.bf16.mxu0 0
    %1628 = vmatpush1.bf16.msra.mxu0 0
    %1629 = vmatprep.subr.bf16.mxu0 0
    %1630 = vmatpush1.bf16.msra.mxu0 0
    %1631 = vmatprep.subr.bf16.mxu0 0
    %1632 = vmatpush1.bf16.msra.mxu0 %v1615
    %1633 = vmatprep.subr.bf16.mxu0 0
    %1634 = vmatpush2.bf16.msra.mxu0 0
    %1635 = vmatprep.subr.bf16.mxu0 0
    %1636 = vmatpush2.bf16.msra.mxu0 0
    %1637 = vmatprep.subr.bf16.mxu0 0
    %1638 = vmatpush2.bf16.msra.mxu0 0
    %1639 = vmatprep.subr.bf16.mxu0 0
    %1640 = vmatpush2.bf16.msra.mxu0 0
    %1641 = vmatprep.subr.bf16.mxu0 0
    %1642 = vmatpush2.bf16.msra.mxu0 0
    %1643 = vmatprep.subr.bf16.mxu0 0
    %1644 = vmatpush2.bf16.msra.mxu0 0
    %1645 = vmatprep.subr.bf16.mxu0 0
    %1646 = vmatpush2.bf16.msra.mxu0 0
    %1647 = vmatprep.subr.bf16.mxu0 0
    %1648 = vmatpush2.bf16.msra.mxu0 0
    %1649 = vmatprep.mubr.bf16.mxu0 0
    %1650 = vmatmul.mubr.bf16.gmra.mxu0 %v1612
    %v1651 = vpop.f32.mrf.mxu0
    %v1652 = vadd.f32 0.0, %v1651
    %v1653 = vpop.f32.mrf.mxu0
    %v1654 = vpop.f32.mrf.mxu0
    %v1655 = vpop.f32.mrf.mxu0
    %1656 = vdwg.mxu0
    %v1658 = vsel %vm1233, %v1415, 0
    %v1661 = vsel %vm1429, %v485, 0
    %1663 = vmatprep.subr.bf16.mxu0 0
    %1664 = vmatpush1.bf16.msra.mxu0 0
    %1665 = vmatprep.subr.bf16.mxu0 0
    %1666 = vmatpush1.bf16.msra.mxu0 0
    %1667 = vmatprep.subr.bf16.mxu0 0
    %1668 = vmatpush1.bf16.msra.mxu0 0
    %1669 = vmatprep.subr.bf16.mxu0 0
    %1670 = vmatpush1.bf16.msra.mxu0 0
    %1671 = vmatprep.subr.bf16.mxu0 0
    %1672 = vmatpush1.bf16.msra.mxu0 0
    %1673 = vmatprep.subr.bf16.mxu0 0
    %1674 = vmatpush1.bf16.msra.mxu0 0
    %1675 = vmatprep.subr.bf16.mxu0 0
    %1676 = vmatpush1.bf16.msra.mxu0 0
    %1677 = vmatprep.subr.bf16.mxu0 0
    %1678 = vmatpush1.bf16.msra.mxu0 %v1661
    %1679 = vmatprep.subr.bf16.mxu0 0
    %1680 = vmatpush2.bf16.msra.mxu0 0
    %1681 = vmatprep.subr.bf16.mxu0 0
    %1682 = vmatpush2.bf16.msra.mxu0 0
    %1683 = vmatprep.subr.bf16.mxu0 0
    %1684 = vmatpush2.bf16.msra.mxu0 0
    %1685 = vmatprep.subr.bf16.mxu0 0
    %1686 = vmatpush2.bf16.msra.mxu0 0
    %1687 = vmatprep.subr.bf16.mxu0 0
    %1688 = vmatpush2.bf16.msra.mxu0 0
    %1689 = vmatprep.subr.bf16.mxu0 0
    %1690 = vmatpush2.bf16.msra.mxu0 0
    %1691 = vmatprep.subr.bf16.mxu0 0
    %1692 = vmatpush2.bf16.msra.mxu0 0
    %1693 = vmatprep.subr.bf16.mxu0 0
    %1694 = vmatpush2.bf16.msra.mxu0 0
    %1695 = vmatprep.mubr.bf16.mxu0 0
    %1696 = vmatmul.mubr.bf16.gmra.mxu0 %v1658
    %v1697 = vpop.f32.mrf.mxu0
    %v1698 = vadd.f32 0.0, %v1697
    %v1699 = vpop.f32.mrf.mxu0
    %v1700 = vpop.f32.mrf.mxu0
    %v1701 = vpop.f32.mrf.mxu0
    %1702 = vdwg.mxu0
    %v1704 = vsel %vm1233, %v1416, 0
    %v1707 = vsel %vm1429, %v486, 0
    %1709 = vmatprep.subr.bf16.mxu0 0
    %1710 = vmatpush1.bf16.msra.mxu0 0
    %1711 = vmatprep.subr.bf16.mxu0 0
    %1712 = vmatpush1.bf16.msra.mxu0 0
    %1713 = vmatprep.subr.bf16.mxu0 0
    %1714 = vmatpush1.bf16.msra.mxu0 0
    %1715 = vmatprep.subr.bf16.mxu0 0
    %1716 = vmatpush1.bf16.msra.mxu0 0
    %1717 = vmatprep.subr.bf16.mxu0 0
    %1718 = vmatpush1.bf16.msra.mxu0 0
    %1719 = vmatprep.subr.bf16.mxu0 0
    %1720 = vmatpush1.bf16.msra.mxu0 0
    %1721 = vmatprep.subr.bf16.mxu0 0
    %1722 = vmatpush1.bf16.msra.mxu0 0
    %1723 = vmatprep.subr.bf16.mxu0 0
    %1724 = vmatpush1.bf16.msra.mxu0 %v1707
    %1725 = vmatprep.subr.bf16.mxu0 0
    %1726 = vmatpush2.bf16.msra.mxu0 0
    %1727 = vmatprep.subr.bf16.mxu0 0
    %1728 = vmatpush2.bf16.msra.mxu0 0
    %1729 = vmatprep.subr.bf16.mxu0 0
    %1730 = vmatpush2.bf16.msra.mxu0 0
    %1731 = vmatprep.subr.bf16.mxu0 0
    %1732 = vmatpush2.bf16.msra.mxu0 0
    %1733 = vmatprep.subr.bf16.mxu0 0
    %1734 = vmatpush2.bf16.msra.mxu0 0
    %1735 = vmatprep.subr.bf16.mxu0 0
    %1736 = vmatpush2.bf16.msra.mxu0 0
    %1737 = vmatprep.subr.bf16.mxu0 0
    %1738 = vmatpush2.bf16.msra.mxu0 0
    %1739 = vmatprep.subr.bf16.mxu0 0
    %1740 = vmatpush2.bf16.msra.mxu0 0
    %1741 = vmatprep.mubr.bf16.mxu0 0
    %1742 = vmatmul.mubr.bf16.gmra.mxu0 %v1704
    %v1743 = vpop.f32.mrf.mxu0
    %v1744 = vadd.f32 0.0, %v1743
    %v1745 = vpop.f32.mrf.mxu0
    %v1746 = vpop.f32.mrf.mxu0
    %v1747 = vpop.f32.mrf.mxu0
    %1748 = vdwg.mxu0
    %v1750 = vsel %vm1233, %v1417, 0
    %v1753 = vsel %vm1429, %v487, 0
    %1755 = vmatprep.subr.bf16.mxu0 0
    %1756 = vmatpush1.bf16.msra.mxu0 0
    %1757 = vmatprep.subr.bf16.mxu0 0
    %1758 = vmatpush1.bf16.msra.mxu0 0
    %1759 = vmatprep.subr.bf16.mxu0 0
    %1760 = vmatpush1.bf16.msra.mxu0 0
    %1761 = vmatprep.subr.bf16.mxu0 0
    %1762 = vmatpush1.bf16.msra.mxu0 0
    %1763 = vmatprep.subr.bf16.mxu0 0
    %1764 = vmatpush1.bf16.msra.mxu0 0
    %1765 = vmatprep.subr.bf16.mxu0 0
    %1766 = vmatpush1.bf16.msra.mxu0 0
    %1767 = vmatprep.subr.bf16.mxu0 0
    %1768 = vmatpush1.bf16.msra.mxu0 0
    %1769 = vmatprep.subr.bf16.mxu0 0
    %1770 = vmatpush1.bf16.msra.mxu0 %v1753
    %1771 = vmatprep.subr.bf16.mxu0 0
    %1772 = vmatpush2.bf16.msra.mxu0 0
    %1773 = vmatprep.subr.bf16.mxu0 0
    %1774 = vmatpush2.bf16.msra.mxu0 0
    %1775 = vmatprep.subr.bf16.mxu0 0
    %1776 = vmatpush2.bf16.msra.mxu0 0
    %1777 = vmatprep.subr.bf16.mxu0 0
    %1778 = vmatpush2.bf16.msra.mxu0 0
    %1779 = vmatprep.subr.bf16.mxu0 0
    %1780 = vmatpush2.bf16.msra.mxu0 0
    %1781 = vmatprep.subr.bf16.mxu0 0
    %1782 = vmatpush2.bf16.msra.mxu0 0
    %1783 = vmatprep.subr.bf16.mxu0 0
    %1784 = vmatpush2.bf16.msra.mxu0 0
    %1785 = vmatprep.subr.bf16.mxu0 0
    %1786 = vmatpush2.bf16.msra.mxu0 0
    %1787 = vmatprep.mubr.bf16.mxu0 0
    %1788 = vmatmul.mubr.bf16.gmra.mxu0 %v1750
    %v1789 = vpop.f32.mrf.mxu0
    %v1790 = vadd.f32 0.0, %v1789
    %v1791 = vpop.f32.mrf.mxu0
    %v1792 = vpop.f32.mrf.mxu0
    %v1793 = vpop.f32.mrf.mxu0
    %1794 = vdwg.mxu0
    %v1796 = vsel %vm1233, %v1418, 0
    %v1799 = vsel %vm1429, %v488, 0
    %1801 = vmatprep.subr.bf16.mxu0 0
    %1802 = vmatpush1.bf16.msra.mxu0 0
    %1803 = vmatprep.subr.bf16.mxu0 0
    %1804 = vmatpush1.bf16.msra.mxu0 0
    %1805 = vmatprep.subr.bf16.mxu0 0
    %1806 = vmatpush1.bf16.msra.mxu0 0
    %1807 = vmatprep.subr.bf16.mxu0 0
    %1808 = vmatpush1.bf16.msra.mxu0 0
    %1809 = vmatprep.subr.bf16.mxu0 0
    %1810 = vmatpush1.bf16.msra.mxu0 0
    %1811 = vmatprep.subr.bf16.mxu0 0
    %1812 = vmatpush1.bf16.msra.mxu0 0
    %1813 = vmatprep.subr.bf16.mxu0 0
    %1814 = vmatpush1.bf16.msra.mxu0 0
    %1815 = vmatprep.subr.bf16.mxu0 0
    %1816 = vmatpush1.bf16.msra.mxu0 %v1799
    %1817 = vmatprep.subr.bf16.mxu0 0
    %1818 = vmatpush2.bf16.msra.mxu0 0
    %1819 = vmatprep.subr.bf16.mxu0 0
    %1820 = vmatpush2.bf16.msra.mxu0 0
    %1821 = vmatprep.subr.bf16.mxu0 0
    %1822 = vmatpush2.bf16.msra.mxu0 0
    %1823 = vmatprep.subr.bf16.mxu0 0
    %1824 = vmatpush2.bf16.msra.mxu0 0
    %1825 = vmatprep.subr.bf16.mxu0 0
    %1826 = vmatpush2.bf16.msra.mxu0 0
    %1827 = vmatprep.subr.bf16.mxu0 0
    %1828 = vmatpush2.bf16.msra.mxu0 0
    %1829 = vmatprep.subr.bf16.mxu0 0
    %1830 = vmatpush2.bf16.msra.mxu0 0
    %1831 = vmatprep.subr.bf16.mxu0 0
    %1832 = vmatpush2.bf16.msra.mxu0 0
    %1833 = vmatprep.mubr.bf16.mxu0 0
    %1834 = vmatmul.mubr.bf16.gmra.mxu0 %v1796
    %v1835 = vpop.f32.mrf.mxu0
    %v1836 = vadd.f32 0.0, %v1835
    %v1837 = vpop.f32.mrf.mxu0
    %v1838 = vpop.f32.mrf.mxu0
    %v1839 = vpop.f32.mrf.mxu0
    %1840 = vdwg.mxu0
    %v1842 = vsel %vm1233, %v1419, 0
    %v1845 = vsel %vm1429, %v489, 0
    %1847 = vmatprep.subr.bf16.mxu0 0
    %1848 = vmatpush1.bf16.msra.mxu0 0
    %1849 = vmatprep.subr.bf16.mxu0 0
    %1850 = vmatpush1.bf16.msra.mxu0 0
    %1851 = vmatprep.subr.bf16.mxu0 0
    %1852 = vmatpush1.bf16.msra.mxu0 0
    %1853 = vmatprep.subr.bf16.mxu0 0
    %1854 = vmatpush1.bf16.msra.mxu0 0
    %1855 = vmatprep.subr.bf16.mxu0 0
    %1856 = vmatpush1.bf16.msra.mxu0 0
    %1857 = vmatprep.subr.bf16.mxu0 0
    %1858 = vmatpush1.bf16.msra.mxu0 0
    %1859 = vmatprep.subr.bf16.mxu0 0
    %1860 = vmatpush1.bf16.msra.mxu0 0
    %1861 = vmatprep.subr.bf16.mxu0 0
    %1862 = vmatpush1.bf16.msra.mxu0 %v1845
    %1863 = vmatprep.subr.bf16.mxu0 0
    %1864 = vmatpush2.bf16.msra.mxu0 0
    %1865 = vmatprep.subr.bf16.mxu0 0
    %1866 = vmatpush2.bf16.msra.mxu0 0
    %1867 = vmatprep.subr.bf16.mxu0 0
    %1868 = vmatpush2.bf16.msra.mxu0 0
    %1869 = vmatprep.subr.bf16.mxu0 0
    %1870 = vmatpush2.bf16.msra.mxu0 0
    %1871 = vmatprep.subr.bf16.mxu0 0
    %1872 = vmatpush2.bf16.msra.mxu0 0
    %1873 = vmatprep.subr.bf16.mxu0 0
    %1874 = vmatpush2.bf16.msra.mxu0 0
    %1875 = vmatprep.subr.bf16.mxu0 0
    %1876 = vmatpush2.bf16.msra.mxu0 0
    %1877 = vmatprep.subr.bf16.mxu0 0
    %1878 = vmatpush2.bf16.msra.mxu0 0
    %1879 = vmatprep.mubr.bf16.mxu0 0
    %1880 = vmatmul.mubr.bf16.gmra.mxu0 %v1842
    %v1881 = vpop.f32.mrf.mxu0
    %v1882 = vadd.f32 0.0, %v1881
    %v1883 = vpop.f32.mrf.mxu0
    %v1884 = vpop.f32.mrf.mxu0
    %v1885 = vpop.f32.mrf.mxu0
    %1886 = vdwg.mxu0
    %v1888 = vsel %vm1233, %v1420, 0
    %v1891 = vsel %vm1429, %v490, 0
    %1893 = vmatprep.subr.bf16.mxu0 0
    %1894 = vmatpush1.bf16.msra.mxu0 0
    %1895 = vmatprep.subr.bf16.mxu0 0
    %1896 = vmatpush1.bf16.msra.mxu0 0
    %1897 = vmatprep.subr.bf16.mxu0 0
    %1898 = vmatpush1.bf16.msra.mxu0 0
    %1899 = vmatprep.subr.bf16.mxu0 0
    %1900 = vmatpush1.bf16.msra.mxu0 0
    %1901 = vmatprep.subr.bf16.mxu0 0
    %1902 = vmatpush1.bf16.msra.mxu0 0
    %1903 = vmatprep.subr.bf16.mxu0 0
    %1904 = vmatpush1.bf16.msra.mxu0 0
    %1905 = vmatprep.subr.bf16.mxu0 0
    %1906 = vmatpush1.bf16.msra.mxu0 0
    %1907 = vmatprep.subr.bf16.mxu0 0
    %1908 = vmatpush1.bf16.msra.mxu0 %v1891
    %1909 = vmatprep.subr.bf16.mxu0 0
    %1910 = vmatpush2.bf16.msra.mxu0 0
    %1911 = vmatprep.subr.bf16.mxu0 0
    %1912 = vmatpush2.bf16.msra.mxu0 0
    %1913 = vmatprep.subr.bf16.mxu0 0
    %1914 = vmatpush2.bf16.msra.mxu0 0
    %1915 = vmatprep.subr.bf16.mxu0 0
    %1916 = vmatpush2.bf16.msra.mxu0 0
    %1917 = vmatprep.subr.bf16.mxu0 0
    %1918 = vmatpush2.bf16.msra.mxu0 0
    %1919 = vmatprep.subr.bf16.mxu0 0
    %1920 = vmatpush2.bf16.msra.mxu0 0
    %1921 = vmatprep.subr.bf16.mxu0 0
    %1922 = vmatpush2.bf16.msra.mxu0 0
    %1923 = vmatprep.subr.bf16.mxu0 0
    %1924 = vmatpush2.bf16.msra.mxu0 0
    %1925 = vmatprep.mubr.bf16.mxu0 0
    %1926 = vmatmul.mubr.bf16.gmra.mxu0 %v1888
    %v1927 = vpop.f32.mrf.mxu0
    %v1928 = vadd.f32 0.0, %v1927
    %v1929 = vpop.f32.mrf.mxu0
    %v1930 = vpop.f32.mrf.mxu0
    %v1931 = vpop.f32.mrf.mxu0
    %1932 = vdwg.mxu0
    %v1934 = vsel %vm1233, %v1421, 0
    %v1937 = vsel %vm1429, %v491, 0
    %1939 = vmatprep.subr.bf16.mxu0 0
    %1940 = vmatpush1.bf16.msra.mxu0 0
    %1941 = vmatprep.subr.bf16.mxu0 0
    %1942 = vmatpush1.bf16.msra.mxu0 0
    %1943 = vmatprep.subr.bf16.mxu0 0
    %1944 = vmatpush1.bf16.msra.mxu0 0
    %1945 = vmatprep.subr.bf16.mxu0 0
    %1946 = vmatpush1.bf16.msra.mxu0 0
    %1947 = vmatprep.subr.bf16.mxu0 0
    %1948 = vmatpush1.bf16.msra.mxu0 0
    %1949 = vmatprep.subr.bf16.mxu0 0
    %1950 = vmatpush1.bf16.msra.mxu0 0
    %1951 = vmatprep.subr.bf16.mxu0 0
    %1952 = vmatpush1.bf16.msra.mxu0 0
    %1953 = vmatprep.subr.bf16.mxu0 0
    %1954 = vmatpush1.bf16.msra.mxu0 %v1937
    %1955 = vmatprep.subr.bf16.mxu0 0
    %1956 = vmatpush2.bf16.msra.mxu0 0
    %1957 = vmatprep.subr.bf16.mxu0 0
    %1958 = vmatpush2.bf16.msra.mxu0 0
    %1959 = vmatprep.subr.bf16.mxu0 0
    %1960 = vmatpush2.bf16.msra.mxu0 0
    %1961 = vmatprep.subr.bf16.mxu0 0
    %1962 = vmatpush2.bf16.msra.mxu0 0
    %1963 = vmatprep.subr.bf16.mxu0 0
    %1964 = vmatpush2.bf16.msra.mxu0 0
    %1965 = vmatprep.subr.bf16.mxu0 0
    %1966 = vmatpush2.bf16.msra.mxu0 0
    %1967 = vmatprep.subr.bf16.mxu0 0
    %1968 = vmatpush2.bf16.msra.mxu0 0
    %1969 = vmatprep.subr.bf16.mxu0 0
    %1970 = vmatpush2.bf16.msra.mxu0 0
    %1971 = vmatprep.mubr.bf16.mxu0 0
    %1972 = vmatmul.mubr.bf16.gmra.mxu0 %v1934
    %v1973 = vpop.f32.mrf.mxu0
    %v1974 = vadd.f32 0.0, %v1973
    %v1975 = vpop.f32.mrf.mxu0
    %v1976 = vpop.f32.mrf.mxu0
    %v1977 = vpop.f32.mrf.mxu0
    %1978 = vdwg.mxu0
    %v1980 = vsel %vm1233, %v1422, 0
    %v1983 = vsel %vm1429, %v492, 0
    %1985 = vmatprep.subr.bf16.mxu0 0
    %1986 = vmatpush1.bf16.msra.mxu0 0
    %1987 = vmatprep.subr.bf16.mxu0 0
    %1988 = vmatpush1.bf16.msra.mxu0 0
    %1989 = vmatprep.subr.bf16.mxu0 0
    %1990 = vmatpush1.bf16.msra.mxu0 0
    %1991 = vmatprep.subr.bf16.mxu0 0
    %1992 = vmatpush1.bf16.msra.mxu0 0
    %1993 = vmatprep.subr.bf16.mxu0 0
    %1994 = vmatpush1.bf16.msra.mxu0 0
    %1995 = vmatprep.subr.bf16.mxu0 0
    %1996 = vmatpush1.bf16.msra.mxu0 0
    %1997 = vmatprep.subr.bf16.mxu0 0
    %1998 = vmatpush1.bf16.msra.mxu0 0
    %1999 = vmatprep.subr.bf16.mxu0 0
    %2000 = vmatpush1.bf16.msra.mxu0 %v1983
    %2001 = vmatprep.subr.bf16.mxu0 0
    %2002 = vmatpush2.bf16.msra.mxu0 0
    %2003 = vmatprep.subr.bf16.mxu0 0
    %2004 = vmatpush2.bf16.msra.mxu0 0
    %2005 = vmatprep.subr.bf16.mxu0 0
    %2006 = vmatpush2.bf16.msra.mxu0 0
    %2007 = vmatprep.subr.bf16.mxu0 0
    %2008 = vmatpush2.bf16.msra.mxu0 0
    %2009 = vmatprep.subr.bf16.mxu0 0
    %2010 = vmatpush2.bf16.msra.mxu0 0
    %2011 = vmatprep.subr.bf16.mxu0 0
    %2012 = vmatpush2.bf16.msra.mxu0 0
    %2013 = vmatprep.subr.bf16.mxu0 0
    %2014 = vmatpush2.bf16.msra.mxu0 0
    %2015 = vmatprep.subr.bf16.mxu0 0
    %2016 = vmatpush2.bf16.msra.mxu0 0
    %2017 = vmatprep.mubr.bf16.mxu0 0
    %2018 = vmatmul.mubr.bf16.gmra.mxu0 %v1980
    %v2019 = vpop.f32.mrf.mxu0
    %v2020 = vadd.f32 0.0, %v2019
    %v2021 = vpop.f32.mrf.mxu0
    %v2022 = vpop.f32.mrf.mxu0
    %v2023 = vpop.f32.mrf.mxu0
    %2024 = vdwg.mxu0
    %v2026 = vsel %vm1233, %v1423, 0
    %v2029 = vsel %vm1429, %v493, 0
    %2031 = vmatprep.subr.bf16.mxu0 0
    %2032 = vmatpush1.bf16.msra.mxu0 0
    %2033 = vmatprep.subr.bf16.mxu0 0
    %2034 = vmatpush1.bf16.msra.mxu0 0
    %2035 = vmatprep.subr.bf16.mxu0 0
    %2036 = vmatpush1.bf16.msra.mxu0 0
    %2037 = vmatprep.subr.bf16.mxu0 0
    %2038 = vmatpush1.bf16.msra.mxu0 0
    %2039 = vmatprep.subr.bf16.mxu0 0
    %2040 = vmatpush1.bf16.msra.mxu0 0
    %2041 = vmatprep.subr.bf16.mxu0 0
    %2042 = vmatpush1.bf16.msra.mxu0 0
    %2043 = vmatprep.subr.bf16.mxu0 0
    %2044 = vmatpush1.bf16.msra.mxu0 0
    %2045 = vmatprep.subr.bf16.mxu0 0
    %2046 = vmatpush1.bf16.msra.mxu0 %v2029
    %2047 = vmatprep.subr.bf16.mxu0 0
    %2048 = vmatpush2.bf16.msra.mxu0 0
    %2049 = vmatprep.subr.bf16.mxu0 0
    %2050 = vmatpush2.bf16.msra.mxu0 0
    %2051 = vmatprep.subr.bf16.mxu0 0
    %2052 = vmatpush2.bf16.msra.mxu0 0
    %2053 = vmatprep.subr.bf16.mxu0 0
    %2054 = vmatpush2.bf16.msra.mxu0 0
    %2055 = vmatprep.subr.bf16.mxu0 0
    %2056 = vmatpush2.bf16.msra.mxu0 0
    %2057 = vmatprep.subr.bf16.mxu0 0
    %2058 = vmatpush2.bf16.msra.mxu0 0
    %2059 = vmatprep.subr.bf16.mxu0 0
    %2060 = vmatpush2.bf16.msra.mxu0 0
    %2061 = vmatprep.subr.bf16.mxu0 0
    %2062 = vmatpush2.bf16.msra.mxu0 0
    %2063 = vmatprep.mubr.bf16.mxu0 0
    %2064 = vmatmul.mubr.bf16.gmra.mxu0 %v2026
    %v2065 = vpop.f32.mrf.mxu0
    %v2066 = vadd.f32 0.0, %v2065
    %v2067 = vpop.f32.mrf.mxu0
    %v2068 = vpop.f32.mrf.mxu0
    %v2069 = vpop.f32.mrf.mxu0
    %2070 = vdwg.mxu0
    %v2072 = vsel %vm1233, %v1424, 0
    %v2075 = vsel %vm1429, %v494, 0
    %2077 = vmatprep.subr.bf16.mxu0 0
    %2078 = vmatpush1.bf16.msra.mxu0 0
    %2079 = vmatprep.subr.bf16.mxu0 0
    %2080 = vmatpush1.bf16.msra.mxu0 0
    %2081 = vmatprep.subr.bf16.mxu0 0
    %2082 = vmatpush1.bf16.msra.mxu0 0
    %2083 = vmatprep.subr.bf16.mxu0 0
    %2084 = vmatpush1.bf16.msra.mxu0 0
    %2085 = vmatprep.subr.bf16.mxu0 0
    %2086 = vmatpush1.bf16.msra.mxu0 0
    %2087 = vmatprep.subr.bf16.mxu0 0
    %2088 = vmatpush1.bf16.msra.mxu0 0
    %2089 = vmatprep.subr.bf16.mxu0 0
    %2090 = vmatpush1.bf16.msra.mxu0 0
    %2091 = vmatprep.subr.bf16.mxu0 0
    %2092 = vmatpush1.bf16.msra.mxu0 %v2075
    %2093 = vmatprep.subr.bf16.mxu0 0
    %2094 = vmatpush2.bf16.msra.mxu0 0
    %2095 = vmatprep.subr.bf16.mxu0 0
    %2096 = vmatpush2.bf16.msra.mxu0 0
    %2097 = vmatprep.subr.bf16.mxu0 0
    %2098 = vmatpush2.bf16.msra.mxu0 0
    %2099 = vmatprep.subr.bf16.mxu0 0
    %2100 = vmatpush2.bf16.msra.mxu0 0
    %2101 = vmatprep.subr.bf16.mxu0 0
    %2102 = vmatpush2.bf16.msra.mxu0 0
    %2103 = vmatprep.subr.bf16.mxu0 0
    %2104 = vmatpush2.bf16.msra.mxu0 0
    %2105 = vmatprep.subr.bf16.mxu0 0
    %2106 = vmatpush2.bf16.msra.mxu0 0
    %2107 = vmatprep.subr.bf16.mxu0 0
    %2108 = vmatpush2.bf16.msra.mxu0 0
    %2109 = vmatprep.mubr.bf16.mxu0 0
    %2110 = vmatmul.mubr.bf16.gmra.mxu0 %v2072
    %v2111 = vpop.f32.mrf.mxu0
    %v2112 = vadd.f32 0.0, %v2111
    %v2113 = vpop.f32.mrf.mxu0
    %v2114 = vpop.f32.mrf.mxu0
    %v2115 = vpop.f32.mrf.mxu0
    %2116 = vdwg.mxu0
    %v2118 = vsel %vm1233, %v1425, 0
    %v2121 = vsel %vm1429, %v495, 0
    %2123 = vmatprep.subr.bf16.mxu0 0
    %2124 = vmatpush1.bf16.msra.mxu0 0
    %2125 = vmatprep.subr.bf16.mxu0 0
    %2126 = vmatpush1.bf16.msra.mxu0 0
    %2127 = vmatprep.subr.bf16.mxu0 0
    %2128 = vmatpush1.bf16.msra.mxu0 0
    %2129 = vmatprep.subr.bf16.mxu0 0
    %2130 = vmatpush1.bf16.msra.mxu0 0
    %2131 = vmatprep.subr.bf16.mxu0 0
    %2132 = vmatpush1.bf16.msra.mxu0 0
    %2133 = vmatprep.subr.bf16.mxu0 0
    %2134 = vmatpush1.bf16.msra.mxu0 0
    %2135 = vmatprep.subr.bf16.mxu0 0
    %2136 = vmatpush1.bf16.msra.mxu0 0
    %2137 = vmatprep.subr.bf16.mxu0 0
    %2138 = vmatpush1.bf16.msra.mxu0 %v2121
    %2139 = vmatprep.subr.bf16.mxu0 0
    %2140 = vmatpush2.bf16.msra.mxu0 0
    %2141 = vmatprep.subr.bf16.mxu0 0
    %2142 = vmatpush2.bf16.msra.mxu0 0
    %2143 = vmatprep.subr.bf16.mxu0 0
    %2144 = vmatpush2.bf16.msra.mxu0 0
    %2145 = vmatprep.subr.bf16.mxu0 0
    %2146 = vmatpush2.bf16.msra.mxu0 0
    %2147 = vmatprep.subr.bf16.mxu0 0
    %2148 = vmatpush2.bf16.msra.mxu0 0
    %2149 = vmatprep.subr.bf16.mxu0 0
    %2150 = vmatpush2.bf16.msra.mxu0 0
    %2151 = vmatprep.subr.bf16.mxu0 0
    %2152 = vmatpush2.bf16.msra.mxu0 0
    %2153 = vmatprep.subr.bf16.mxu0 0
    %2154 = vmatpush2.bf16.msra.mxu0 0
    %2155 = vmatprep.mubr.bf16.mxu0 0
    %2156 = vmatmul.mubr.bf16.gmra.mxu0 %v2118
    %v2157 = vpop.f32.mrf.mxu0
    %v2158 = vadd.f32 0.0, %v2157
    %v2159 = vpop.f32.mrf.mxu0
    %v2160 = vpop.f32.mrf.mxu0
    %v2161 = vpop.f32.mrf.mxu0
    %2162 = vdwg.mxu0
    %v2163 = vpack.c.bf16 %v1468, %v1468
    %v2164 = vpack.c.bf16 %v1514, %v1514
    %v2165 = vpack.c.bf16 %v1560, %v1560
    %v2166 = vpack.c.bf16 %v1606, %v1606
    %v2167 = vpack.c.bf16 %v1652, %v1652
    %v2168 = vpack.c.bf16 %v1698, %v1698
    %v2169 = vpack.c.bf16 %v1744, %v1744
    %v2170 = vpack.c.bf16 %v1790, %v1790
    %v2171 = vpack.c.bf16 %v1836, %v1836
    %v2172 = vpack.c.bf16 %v1882, %v1882
    %v2173 = vpack.c.bf16 %v1928, %v1928
    %v2174 = vpack.c.bf16 %v1974, %v1974
    %v2175 = vpack.c.bf16 %v2020, %v2020
    %v2176 = vpack.c.bf16 %v2066, %v2066
    %v2177 = vpack.c.bf16 %v2112, %v2112
    %v2178 = vpack.c.bf16 %v2158, %v2158
    %v2179 = vld [vmem:[#allocation13] sm:$0x3]
    %v2180 = vld [vmem:[#allocation13 + $0x2] sm:$0x3]
    %v2181 = vld [vmem:[#allocation13 + $0x4] sm:$0x3]
    %v2182 = vld [vmem:[#allocation13 + $0x6] sm:$0x3]
    %v2183 = vld [vmem:[#allocation13 + $0x8] sm:$0x3]
    %v2184 = vld [vmem:[#allocation13 + $0xa] sm:$0x3]
    %v2185 = vld [vmem:[#allocation13 + $0xc] sm:$0x3]
    %v2186 = vld [vmem:[#allocation13 + $0xe] sm:$0x3]
    %v2189 = vunpack.c.l.b16 %v2163
    %v2190 = vunpack.c.l.b16 %v2164
    %v2191 = vpack.c.b16 %v2190, %v2189
    %v2193 = vsel %vm496, %v2191, 0
    %vm2195 = vcmask 1041408
    %v2197 = vsel %vm2195, %v2179, 0
    %2199 = vmatprep.subr.bf16.mxu0 0
    %2200 = vmatpush1.bf16.msra.mxu0 0
    %2201 = vmatprep.subr.bf16.mxu0 0
    %2202 = vmatpush1.bf16.msra.mxu0 0
    %2203 = vmatprep.subr.bf16.mxu0 0
    %2204 = vmatpush1.bf16.msra.mxu0 0
    %2205 = vmatprep.subr.bf16.mxu0 0
    %2206 = vmatpush1.bf16.msra.mxu0 0
    %2207 = vmatprep.subr.bf16.mxu0 0
    %2208 = vmatpush1.bf16.msra.mxu0 0
    %2209 = vmatprep.subr.bf16.mxu0 0
    %2210 = vmatpush1.bf16.msra.mxu0 0
    %2211 = vmatprep.subr.bf16.mxu0 0
    %2212 = vmatpush1.bf16.msra.mxu0 0
    %2213 = vmatprep.subr.bf16.mxu0 0
    %2214 = vmatpush1.bf16.msra.mxu0 %v2197
    %2215 = vmatprep.subr.bf16.mxu0 0
    %2216 = vmatpush2.bf16.msra.mxu0 0
    %2217 = vmatprep.subr.bf16.mxu0 0
    %2218 = vmatpush2.bf16.msra.mxu0 0
    %2219 = vmatprep.subr.bf16.mxu0 0
    %2220 = vmatpush2.bf16.msra.mxu0 0
    %2221 = vmatprep.subr.bf16.mxu0 0
    %2222 = vmatpush2.bf16.msra.mxu0 0
    %2223 = vmatprep.subr.bf16.mxu0 0
    %2224 = vmatpush2.bf16.msra.mxu0 0
    %2225 = vmatprep.subr.bf16.mxu0 0
    %2226 = vmatpush2.bf16.msra.mxu0 0
    %2227 = vmatprep.subr.bf16.mxu0 0
    %2228 = vmatpush2.bf16.msra.mxu0 0
    %2229 = vmatprep.subr.bf16.mxu0 0
    %2230 = vmatpush2.bf16.msra.mxu0 0
    %2231 = vmatprep.mubr.bf16.mxu0 0
    %2232 = vmatmul.mubr.bf16.gmra.mxu0 %v2193
    %v2233 = vpop.f32.mrf.mxu0
    %v2234 = vadd.f32 0.0, %v2233
    %v2235 = vpop.f32.mrf.mxu0
    %v2236 = vpop.f32.mrf.mxu0
    %v2237 = vadd.f32 0.0, %v2236
    %v2238 = vpop.f32.mrf.mxu0
    %2239 = vdwg.mxu0
    %v2242 = vunpack.c.l.b16 %v2165
    %v2243 = vunpack.c.l.b16 %v2166
    %v2244 = vpack.c.b16 %v2243, %v2242
    %v2246 = vsel %vm496, %v2244, 0
    %v2249 = vsel %vm2195, %v2180, 0
    %2251 = vmatprep.subr.bf16.mxu0 0
    %2252 = vmatpush1.bf16.msra.mxu0 0
    %2253 = vmatprep.subr.bf16.mxu0 0
    %2254 = vmatpush1.bf16.msra.mxu0 0
    %2255 = vmatprep.subr.bf16.mxu0 0
    %2256 = vmatpush1.bf16.msra.mxu0 0
    %2257 = vmatprep.subr.bf16.mxu0 0
    %2258 = vmatpush1.bf16.msra.mxu0 0
    %2259 = vmatprep.subr.bf16.mxu0 0
    %2260 = vmatpush1.bf16.msra.mxu0 0
    %2261 = vmatprep.subr.bf16.mxu0 0
    %2262 = vmatpush1.bf16.msra.mxu0 0
    %2263 = vmatprep.subr.bf16.mxu0 0
    %2264 = vmatpush1.bf16.msra.mxu0 0
    %2265 = vmatprep.subr.bf16.mxu0 0
    %2266 = vmatpush1.bf16.msra.mxu0 %v2249
    %2267 = vmatprep.subr.bf16.mxu0 0
    %2268 = vmatpush2.bf16.msra.mxu0 0
    %2269 = vmatprep.subr.bf16.mxu0 0
    %2270 = vmatpush2.bf16.msra.mxu0 0
    %2271 = vmatprep.subr.bf16.mxu0 0
    %2272 = vmatpush2.bf16.msra.mxu0 0
    %2273 = vmatprep.subr.bf16.mxu0 0
    %2274 = vmatpush2.bf16.msra.mxu0 0
    %2275 = vmatprep.subr.bf16.mxu0 0
    %2276 = vmatpush2.bf16.msra.mxu0 0
    %2277 = vmatprep.subr.bf16.mxu0 0
    %2278 = vmatpush2.bf16.msra.mxu0 0
    %2279 = vmatprep.subr.bf16.mxu0 0
    %2280 = vmatpush2.bf16.msra.mxu0 0
    %2281 = vmatprep.subr.bf16.mxu0 0
    %2282 = vmatpush2.bf16.msra.mxu0 0
    %2283 = vmatprep.mubr.bf16.mxu0 0
    %2284 = vmatmul.mubr.bf16.gmra.mxu0 %v2246
    %v2285 = vpop.f32.mrf.mxu0
    %v2286 = vadd.f32 0.0, %v2285
    %v2287 = vpop.f32.mrf.mxu0
    %v2288 = vpop.f32.mrf.mxu0
    %v2289 = vadd.f32 0.0, %v2288
    %v2290 = vpop.f32.mrf.mxu0
    %2291 = vdwg.mxu0
    %v2294 = vunpack.c.l.b16 %v2167
    %v2295 = vunpack.c.l.b16 %v2168
    %v2296 = vpack.c.b16 %v2295, %v2294
    %v2298 = vsel %vm496, %v2296, 0
    %v2301 = vsel %vm2195, %v2181, 0
    %2303 = vmatprep.subr.bf16.mxu0 0
    %2304 = vmatpush1.bf16.msra.mxu0 0
    %2305 = vmatprep.subr.bf16.mxu0 0
    %2306 = vmatpush1.bf16.msra.mxu0 0
    %2307 = vmatprep.subr.bf16.mxu0 0
    %2308 = vmatpush1.bf16.msra.mxu0 0
    %2309 = vmatprep.subr.bf16.mxu0 0
    %2310 = vmatpush1.bf16.msra.mxu0 0
    %2311 = vmatprep.subr.bf16.mxu0 0
    %2312 = vmatpush1.bf16.msra.mxu0 0
    %2313 = vmatprep.subr.bf16.mxu0 0
    %2314 = vmatpush1.bf16.msra.mxu0 0
    %2315 = vmatprep.subr.bf16.mxu0 0
    %2316 = vmatpush1.bf16.msra.mxu0 0
    %2317 = vmatprep.subr.bf16.mxu0 0
    %2318 = vmatpush1.bf16.msra.mxu0 %v2301
    %2319 = vmatprep.subr.bf16.mxu0 0
    %2320 = vmatpush2.bf16.msra.mxu0 0
    %2321 = vmatprep.subr.bf16.mxu0 0
    %2322 = vmatpush2.bf16.msra.mxu0 0
    %2323 = vmatprep.subr.bf16.mxu0 0
    %2324 = vmatpush2.bf16.msra.mxu0 0
    %2325 = vmatprep.subr.bf16.mxu0 0
    %2326 = vmatpush2.bf16.msra.mxu0 0
    %2327 = vmatprep.subr.bf16.mxu0 0
    %2328 = vmatpush2.bf16.msra.mxu0 0
    %2329 = vmatprep.subr.bf16.mxu0 0
    %2330 = vmatpush2.bf16.msra.mxu0 0
    %2331 = vmatprep.subr.bf16.mxu0 0
    %2332 = vmatpush2.bf16.msra.mxu0 0
    %2333 = vmatprep.subr.bf16.mxu0 0
    %2334 = vmatpush2.bf16.msra.mxu0 0
    %2335 = vmatprep.mubr.bf16.mxu0 0
    %2336 = vmatmul.mubr.bf16.gmra.mxu0 %v2298
    %v2337 = vpop.f32.mrf.mxu0
    %v2338 = vadd.f32 0.0, %v2337
    %v2339 = vpop.f32.mrf.mxu0
    %v2340 = vpop.f32.mrf.mxu0
    %v2341 = vadd.f32 0.0, %v2340
    %v2342 = vpop.f32.mrf.mxu0
    %2343 = vdwg.mxu0
    %v2346 = vunpack.c.l.b16 %v2169
    %v2347 = vunpack.c.l.b16 %v2170
    %v2348 = vpack.c.b16 %v2347, %v2346
    %v2350 = vsel %vm496, %v2348, 0
    %v2353 = vsel %vm2195, %v2182, 0
    %2355 = vmatprep.subr.bf16.mxu0 0
    %2356 = vmatpush1.bf16.msra.mxu0 0
    %2357 = vmatprep.subr.bf16.mxu0 0
    %2358 = vmatpush1.bf16.msra.mxu0 0
    %2359 = vmatprep.subr.bf16.mxu0 0
    %2360 = vmatpush1.bf16.msra.mxu0 0
    %2361 = vmatprep.subr.bf16.mxu0 0
    %2362 = vmatpush1.bf16.msra.mxu0 0
    %2363 = vmatprep.subr.bf16.mxu0 0
    %2364 = vmatpush1.bf16.msra.mxu0 0
    %2365 = vmatprep.subr.bf16.mxu0 0
    %2366 = vmatpush1.bf16.msra.mxu0 0
    %2367 = vmatprep.subr.bf16.mxu0 0
    %2368 = vmatpush1.bf16.msra.mxu0 0
    %2369 = vmatprep.subr.bf16.mxu0 0
    %2370 = vmatpush1.bf16.msra.mxu0 %v2353
    %2371 = vmatprep.subr.bf16.mxu0 0
    %2372 = vmatpush2.bf16.msra.mxu0 0
    %2373 = vmatprep.subr.bf16.mxu0 0
    %2374 = vmatpush2.bf16.msra.mxu0 0
    %2375 = vmatprep.subr.bf16.mxu0 0
    %2376 = vmatpush2.bf16.msra.mxu0 0
    %2377 = vmatprep.subr.bf16.mxu0 0
    %2378 = vmatpush2.bf16.msra.mxu0 0
    %2379 = vmatprep.subr.bf16.mxu0 0
    %2380 = vmatpush2.bf16.msra.mxu0 0
    %2381 = vmatprep.subr.bf16.mxu0 0
    %2382 = vmatpush2.bf16.msra.mxu0 0
    %2383 = vmatprep.subr.bf16.mxu0 0
    %2384 = vmatpush2.bf16.msra.mxu0 0
    %2385 = vmatprep.subr.bf16.mxu0 0
    %2386 = vmatpush2.bf16.msra.mxu0 0
    %2387 = vmatprep.mubr.bf16.mxu0 0
    %2388 = vmatmul.mubr.bf16.gmra.mxu0 %v2350
    %v2389 = vpop.f32.mrf.mxu0
    %v2390 = vadd.f32 0.0, %v2389
    %v2391 = vpop.f32.mrf.mxu0
    %v2392 = vpop.f32.mrf.mxu0
    %v2393 = vadd.f32 0.0, %v2392
    %v2394 = vpop.f32.mrf.mxu0
    %2395 = vdwg.mxu0
    %v2398 = vunpack.c.l.b16 %v2171
    %v2399 = vunpack.c.l.b16 %v2172
    %v2400 = vpack.c.b16 %v2399, %v2398
    %v2402 = vsel %vm496, %v2400, 0
    %v2405 = vsel %vm2195, %v2183, 0
    %2407 = vmatprep.subr.bf16.mxu0 0
    %2408 = vmatpush1.bf16.msra.mxu0 0
    %2409 = vmatprep.subr.bf16.mxu0 0
    %2410 = vmatpush1.bf16.msra.mxu0 0
    %2411 = vmatprep.subr.bf16.mxu0 0
    %2412 = vmatpush1.bf16.msra.mxu0 0
    %2413 = vmatprep.subr.bf16.mxu0 0
    %2414 = vmatpush1.bf16.msra.mxu0 0
    %2415 = vmatprep.subr.bf16.mxu0 0
    %2416 = vmatpush1.bf16.msra.mxu0 0
    %2417 = vmatprep.subr.bf16.mxu0 0
    %2418 = vmatpush1.bf16.msra.mxu0 0
    %2419 = vmatprep.subr.bf16.mxu0 0
    %2420 = vmatpush1.bf16.msra.mxu0 0
    %2421 = vmatprep.subr.bf16.mxu0 0
    %2422 = vmatpush1.bf16.msra.mxu0 %v2405
    %2423 = vmatprep.subr.bf16.mxu0 0
    %2424 = vmatpush2.bf16.msra.mxu0 0
    %2425 = vmatprep.subr.bf16.mxu0 0
    %2426 = vmatpush2.bf16.msra.mxu0 0
    %2427 = vmatprep.subr.bf16.mxu0 0
    %2428 = vmatpush2.bf16.msra.mxu0 0
    %2429 = vmatprep.subr.bf16.mxu0 0
    %2430 = vmatpush2.bf16.msra.mxu0 0
    %2431 = vmatprep.subr.bf16.mxu0 0
    %2432 = vmatpush2.bf16.msra.mxu0 0
    %2433 = vmatprep.subr.bf16.mxu0 0
    %2434 = vmatpush2.bf16.msra.mxu0 0
    %2435 = vmatprep.subr.bf16.mxu0 0
    %2436 = vmatpush2.bf16.msra.mxu0 0
    %2437 = vmatprep.subr.bf16.mxu0 0
    %2438 = vmatpush2.bf16.msra.mxu0 0
    %2439 = vmatprep.mubr.bf16.mxu0 0
    %2440 = vmatmul.mubr.bf16.gmra.mxu0 %v2402
    %v2441 = vpop.f32.mrf.mxu0
    %v2442 = vadd.f32 0.0, %v2441
    %v2443 = vpop.f32.mrf.mxu0
    %v2444 = vpop.f32.mrf.mxu0
    %v2445 = vadd.f32 0.0, %v2444
    %v2446 = vpop.f32.mrf.mxu0
    %2447 = vdwg.mxu0
    %v2450 = vunpack.c.l.b16 %v2173
    %v2451 = vunpack.c.l.b16 %v2174
    %v2452 = vpack.c.b16 %v2451, %v2450
    %v2454 = vsel %vm496, %v2452, 0
    %v2457 = vsel %vm2195, %v2184, 0
    %2459 = vmatprep.subr.bf16.mxu0 0
    %2460 = vmatpush1.bf16.msra.mxu0 0
    %2461 = vmatprep.subr.bf16.mxu0 0
    %2462 = vmatpush1.bf16.msra.mxu0 0
    %2463 = vmatprep.subr.bf16.mxu0 0
    %2464 = vmatpush1.bf16.msra.mxu0 0
    %2465 = vmatprep.subr.bf16.mxu0 0
    %2466 = vmatpush1.bf16.msra.mxu0 0
    %2467 = vmatprep.subr.bf16.mxu0 0
    %2468 = vmatpush1.bf16.msra.mxu0 0
    %2469 = vmatprep.subr.bf16.mxu0 0
    %2470 = vmatpush1.bf16.msra.mxu0 0
    %2471 = vmatprep.subr.bf16.mxu0 0
    %2472 = vmatpush1.bf16.msra.mxu0 0
    %2473 = vmatprep.subr.bf16.mxu0 0
    %2474 = vmatpush1.bf16.msra.mxu0 %v2457
    %2475 = vmatprep.subr.bf16.mxu0 0
    %2476 = vmatpush2.bf16.msra.mxu0 0
    %2477 = vmatprep.subr.bf16.mxu0 0
    %2478 = vmatpush2.bf16.msra.mxu0 0
    %2479 = vmatprep.subr.bf16.mxu0 0
    %2480 = vmatpush2.bf16.msra.mxu0 0
    %2481 = vmatprep.subr.bf16.mxu0 0
    %2482 = vmatpush2.bf16.msra.mxu0 0
    %2483 = vmatprep.subr.bf16.mxu0 0
    %2484 = vmatpush2.bf16.msra.mxu0 0
    %2485 = vmatprep.subr.bf16.mxu0 0
    %2486 = vmatpush2.bf16.msra.mxu0 0
    %2487 = vmatprep.subr.bf16.mxu0 0
    %2488 = vmatpush2.bf16.msra.mxu0 0
    %2489 = vmatprep.subr.bf16.mxu0 0
    %2490 = vmatpush2.bf16.msra.mxu0 0
    %2491 = vmatprep.mubr.bf16.mxu0 0
    %2492 = vmatmul.mubr.bf16.gmra.mxu0 %v2454
    %v2493 = vpop.f32.mrf.mxu0
    %v2494 = vadd.f32 0.0, %v2493
    %v2495 = vpop.f32.mrf.mxu0
    %v2496 = vpop.f32.mrf.mxu0
    %v2497 = vadd.f32 0.0, %v2496
    %v2498 = vpop.f32.mrf.mxu0
    %2499 = vdwg.mxu0
    %v2502 = vunpack.c.l.b16 %v2175
    %v2503 = vunpack.c.l.b16 %v2176
    %v2504 = vpack.c.b16 %v2503, %v2502
    %v2506 = vsel %vm496, %v2504, 0
    %v2509 = vsel %vm2195, %v2185, 0
    %2511 = vmatprep.subr.bf16.mxu0 0
    %2512 = vmatpush1.bf16.msra.mxu0 0
    %2513 = vmatprep.subr.bf16.mxu0 0
    %2514 = vmatpush1.bf16.msra.mxu0 0
    %2515 = vmatprep.subr.bf16.mxu0 0
    %2516 = vmatpush1.bf16.msra.mxu0 0
    %2517 = vmatprep.subr.bf16.mxu0 0
    %2518 = vmatpush1.bf16.msra.mxu0 0
    %2519 = vmatprep.subr.bf16.mxu0 0
    %2520 = vmatpush1.bf16.msra.mxu0 0
    %2521 = vmatprep.subr.bf16.mxu0 0
    %2522 = vmatpush1.bf16.msra.mxu0 0
    %2523 = vmatprep.subr.bf16.mxu0 0
    %2524 = vmatpush1.bf16.msra.mxu0 0
    %2525 = vmatprep.subr.bf16.mxu0 0
    %2526 = vmatpush1.bf16.msra.mxu0 %v2509
    %2527 = vmatprep.subr.bf16.mxu0 0
    %2528 = vmatpush2.bf16.msra.mxu0 0
    %2529 = vmatprep.subr.bf16.mxu0 0
    %2530 = vmatpush2.bf16.msra.mxu0 0
    %2531 = vmatprep.subr.bf16.mxu0 0
    %2532 = vmatpush2.bf16.msra.mxu0 0
    %2533 = vmatprep.subr.bf16.mxu0 0
    %2534 = vmatpush2.bf16.msra.mxu0 0
    %2535 = vmatprep.subr.bf16.mxu0 0
    %2536 = vmatpush2.bf16.msra.mxu0 0
    %2537 = vmatprep.subr.bf16.mxu0 0
    %2538 = vmatpush2.bf16.msra.mxu0 0
    %2539 = vmatprep.subr.bf16.mxu0 0
    %2540 = vmatpush2.bf16.msra.mxu0 0
    %2541 = vmatprep.subr.bf16.mxu0 0
    %2542 = vmatpush2.bf16.msra.mxu0 0
    %2543 = vmatprep.mubr.bf16.mxu0 0
    %2544 = vmatmul.mubr.bf16.gmra.mxu0 %v2506
    %v2545 = vpop.f32.mrf.mxu0
    %v2546 = vadd.f32 0.0, %v2545
    %v2547 = vpop.f32.mrf.mxu0
    %v2548 = vpop.f32.mrf.mxu0
    %v2549 = vadd.f32 0.0, %v2548
    %v2550 = vpop.f32.mrf.mxu0
    %2551 = vdwg.mxu0
    %v2554 = vunpack.c.l.b16 %v2177
    %v2555 = vunpack.c.l.b16 %v2178
    %v2556 = vpack.c.b16 %v2555, %v2554
    %v2558 = vsel %vm496, %v2556, 0
    %v2561 = vsel %vm2195, %v2186, 0
    %2563 = vmatprep.subr.bf16.mxu0 0
    %2564 = vmatpush1.bf16.msra.mxu0 0
    %2565 = vmatprep.subr.bf16.mxu0 0
    %2566 = vmatpush1.bf16.msra.mxu0 0
    %2567 = vmatprep.subr.bf16.mxu0 0
    %2568 = vmatpush1.bf16.msra.mxu0 0
    %2569 = vmatprep.subr.bf16.mxu0 0
    %2570 = vmatpush1.bf16.msra.mxu0 0
    %2571 = vmatprep.subr.bf16.mxu0 0
    %2572 = vmatpush1.bf16.msra.mxu0 0
    %2573 = vmatprep.subr.bf16.mxu0 0
    %2574 = vmatpush1.bf16.msra.mxu0 0
    %2575 = vmatprep.subr.bf16.mxu0 0
    %2576 = vmatpush1.bf16.msra.mxu0 0
    %2577 = vmatprep.subr.bf16.mxu0 0
    %2578 = vmatpush1.bf16.msra.mxu0 %v2561
    %2579 = vmatprep.subr.bf16.mxu0 0
    %2580 = vmatpush2.bf16.msra.mxu0 0
    %2581 = vmatprep.subr.bf16.mxu0 0
    %2582 = vmatpush2.bf16.msra.mxu0 0
    %2583 = vmatprep.subr.bf16.mxu0 0
    %2584 = vmatpush2.bf16.msra.mxu0 0
    %2585 = vmatprep.subr.bf16.mxu0 0
    %2586 = vmatpush2.bf16.msra.mxu0 0
    %2587 = vmatprep.subr.bf16.mxu0 0
    %2588 = vmatpush2.bf16.msra.mxu0 0
    %2589 = vmatprep.subr.bf16.mxu0 0
    %2590 = vmatpush2.bf16.msra.mxu0 0
    %2591 = vmatprep.subr.bf16.mxu0 0
    %2592 = vmatpush2.bf16.msra.mxu0 0
    %2593 = vmatprep.subr.bf16.mxu0 0
    %2594 = vmatpush2.bf16.msra.mxu0 0
    %2595 = vmatprep.mubr.bf16.mxu0 0
    %2596 = vmatmul.mubr.bf16.gmra.mxu0 %v2558
    %v2597 = vpop.f32.mrf.mxu0
    %v2598 = vadd.f32 0.0, %v2597
    %v2599 = vpop.f32.mrf.mxu0
    %v2600 = vpop.f32.mrf.mxu0
    %v2601 = vadd.f32 0.0, %v2600
    %v2602 = vpop.f32.mrf.mxu0
    %2603 = vdwg.mxu0
    %v2604 = vsel %vm151, %v2234, 0.0
    %v2605 = vsel %vm151, %v2286, 0.0
    %v2606 = vadd.f32 %v2604, %v2605
    %v2607 = vsel %vm151, %v2338, 0.0
    %v2608 = vadd.f32 %v2606, %v2607
    %v2609 = vsel %vm151, %v2390, 0.0
    %v2610 = vadd.f32 %v2608, %v2609
    %v2611 = vsel %vm151, %v2442, 0.0
    %v2612 = vadd.f32 %v2610, %v2611
    %v2613 = vsel %vm151, %v2494, 0.0
    %v2614 = vadd.f32 %v2612, %v2613
    %v2615 = vsel %vm151, %v2546, 0.0
    %v2616 = vadd.f32 %v2614, %v2615
    %v2617 = vsel %vm151, %v2598, 0.0
    %v2618 = vadd.f32 %v2616, %v2617
    %v2619 = vsel %vm151, %v2237, 0.0
    %v2620 = vsel %vm151, %v2289, 0.0
    %v2621 = vadd.f32 %v2619, %v2620
    %v2622 = vsel %vm151, %v2341, 0.0
    %v2623 = vadd.f32 %v2621, %v2622
    %v2624 = vsel %vm151, %v2393, 0.0
    %v2625 = vadd.f32 %v2623, %v2624
    %v2626 = vsel %vm151, %v2445, 0.0
    %v2627 = vadd.f32 %v2625, %v2626
    %v2628 = vsel %vm151, %v2497, 0.0
    %v2629 = vadd.f32 %v2627, %v2628
    %v2630 = vsel %vm151, %v2549, 0.0
    %v2631 = vadd.f32 %v2629, %v2630
    %v2632 = vsel %vm151, %v2601, 0.0
    %v2633 = vadd.f32 %v2631, %v2632
    %v2634 = vld [vmem:[%s7] sm:$0x1]
    %v2636 = vlaneseq
    %v2637 = vshrl.u32 %v2636, 7
    %v2638 = vsub.s32 0, %v2637
    %v2639 = vrot.slane %v2634, %v2638
    %v2641 = vadd.f32 %v2618, %v2639
    %v2642 = vadd.f32 %v2633, %v2639
    %2643 = vst.msk [vmem:[#allocation14] sm:$0xff] %vm151, %v2641
    %2644 = vst.msk [vmem:[#allocation14 + $0x8] sm:$0xff] %vm151, %v2642
    // Predicated region
    $region62: #{tpu_custom_call.1} parent=1 // pred_check
      _
    $region63: #{tpu_custom_call.1} parent=1 // pred_check_branch
      %2646 = sbr.rel (0) target = $region65
    $region64: #{tpu_custom_call.1} parent=1 // pred_region
      %s2648 = ssub.s32 256, 256
      %2649 = vsyncadd [#allocation4], %s2648
      %s2650 = sshll.u32 [#allocation14], 4
      %s2651 = int_to_ptr.vmem [resolvable:$true] %s2650
      %2656 = dma.vmem_to_hbm [thread:$0]  %s2651, 256, %s8, [#allocation4], 128, 128, 8
    $region65: #{tpu_custom_call.1} parent=1 // pred_fallthru
      _
    // Predicated region
    $region66: #{tpu_custom_call.1} parent=1 // pred_check
      _
    $region67: #{tpu_custom_call.1} parent=1 // pred_check_branch
      %2658 = sbr.rel (0) target = $region69
    $region68: #{tpu_custom_call.1} parent=1 // pred_region
      %2659 = dma.done [#allocation4], 256
    $region69: #{tpu_custom_call.1} parent=1 // pred_fallthru
      _
    %2660 = vsyncpa [#allocation3], 1
    %2661 = vsyncpa [#allocation6], 1
    %2662 = vsyncpa [#allocation9], 1
    %2663 = vsyncpa [#allocation12], 1
    %2664 = vsyncpa [#allocation4], 1

</llo_original>
